<compile_context>
chip_gen: v7x
topology: tpu7x:2x2x1
jax: 0.10.0
libtpu: 0.0.40
codegen_flags: <defaults>
</compile_context>

<pallas_src>
import functools

import jax
import jax.numpy as jnp
from jax import lax
from jax.experimental import pallas as pl
from jax.experimental.pallas import tpu as pltpu


def _head_kernel(x_ref, w_ref, o_ref, *, mask, matmul_dtype, precision):
    """One batch element per grid step.

    x_ref: (1, T, C)    w_ref: (C, 3*Hp) = [Wk | Wq*scale | Wv], zero-padded
    o_ref: (1, T, Hp)   Hp = head_size rounded up to the lane width (128)
    """
    _, T, C = x_ref.shape
    Hp = o_ref.shape[-1]

    x = x_ref[0].astype(matmul_dtype)                            # (T, C)

    # Fused k/q/v projection: one lane-dense MXU matmul, f32 accumulation.
    kqv = jnp.dot(x, w_ref[...],
                  preferred_element_type=jnp.float32,
                  precision=precision)                           # (T, 3*Hp)
    k = kqv[:, 0 * Hp:1 * Hp]
    q = kqv[:, 1 * Hp:2 * Hp]                                    # C**-0.5 folded into Wq
    v = kqv[:, 2 * Hp:3 * Hp]

    # Scores: contract over the head dim directly (no explicit k transpose).
    wei = lax.dot_general(
        q.astype(matmul_dtype), k.astype(matmul_dtype),
        dimension_numbers=(((1,), (1,)), ((), ())),
        preferred_element_type=jnp.float32,
        precision=precision)                                     # (T, T)

    if mask:
        row = lax.broadcasted_iota(jnp.int32, (T, T), 0)
        col = lax.broadcasted_iota(jnp.int32, (T, T), 1)
        # Finite sentinel (not -inf): keeps any fully-masked row NaN-free.
        wei = jnp.where(col <= row, wei, jnp.float32(-1e30))

    # Numerically-stable softmax kept in f32 (v5e has no bf16 VPU/EUP).
    wei = wei - jnp.max(wei, axis=-1, keepdims=True)
    p = jnp.exp(wei)
    p = p / jnp.sum(p, axis=-1, keepdims=True)                   # exact normalization

    # out = softmax(wei) @ v
    out = jnp.dot(p.astype(matmul_dtype), v.astype(matmul_dtype),
                  preferred_element_type=jnp.float32,
                  precision=precision)                           # (T, Hp)
    o_ref[0] = out.astype(o_ref.dtype)


def pack_head_weights(wk, wq, wv, *, n_embd=None, matmul_dtype=jnp.bfloat16):
    """Pack the three (C, H) projection weights ONCE at parameter-init time.

    Produces a (C, 3*Hp) operand [Wk | Wq * n_embd**-0.5 | Wv], zero-padded to a
    128-lane multiple head dim and cast to the MXU operand dtype.  Note: the
    reference module scales scores by n_embd (C) ** -0.5, not head_size ** -0.5;
    that scale is folded into the Wq columns here so the kernel does no score
    multiply.  Zero-padded columns leave the math unchanged.
    """
    C, H = wk.shape
    if n_embd is None:
        n_embd = C
    Hp = pl.cdiv(H, 128) * 128
    pad = Hp - H
    scale = float(n_embd) ** -0.5

    def _pad(w):
        return jnp.pad(w, ((0, 0), (0, pad))) if pad else w

    w_kqv = jnp.concatenate([_pad(wk), _pad(wq * scale), _pad(wv)], axis=1)
    return w_kqv.astype(matmul_dtype)


@functools.partial(jax.jit, static_argnames=("head_size", "mask"))
def head_forward(x, w_kqv, *, head_size, mask=True):
    """x: (B, T, C); w_kqv: packed (C, 3*Hp) weights from pack_head_weights.

    Returns (B, T, head_size) in x.dtype.  MXU operand dtype is taken from
    w_kqv.dtype (bf16 default = native MXU rate on v5e/v6e/v7x); accumulation
    and softmax stay f32.  The f32 operand path uses precision=HIGHEST.
    """
    B, T, C = x.shape
    three_hp = w_kqv.shape[1]
    Hp = three_hp // 3
    matmul_dtype = w_kqv.dtype
    precision = lax.Precision.HIGHEST if matmul_dtype == jnp.float32 else None

    flops = 2 * B * T * C * three_hp + 4 * B * T * T * Hp
    bytes_accessed = (x.size * x.dtype.itemsize
                      + w_kqv.size * w_kqv.dtype.itemsize
                      + B * T * Hp * x.dtype.itemsize)

    out_padded = pl.pallas_call(
        functools.partial(_head_kernel, mask=mask,
                          matmul_dtype=matmul_dtype, precision=precision),
        out_shape=jax.ShapeDtypeStruct((B, T, Hp), x.dtype),
        grid=(B,),
        in_specs=[
            pl.BlockSpec((1, T, C), lambda b: (b, 0, 0)),
            pl.BlockSpec((C, three_hp), lambda b: (0, 0)),
        ],
        out_specs=pl.BlockSpec((1, T, Hp), lambda b: (b, 0, 0)),
        compiler_params=pltpu.CompilerParams(
            dimension_semantics=("parallel",)),      # v7x: shard batch over 2 TCs
        cost_estimate=pl.CostEstimate(
            flops=flops,
            transcendentals=B * T * T,
            bytes_accessed=bytes_accessed),
    )(x, w_kqv)

    return out_padded[:, :, :head_size]               # drop the zero lane padding


def _reference(x, wk, wq, wv, mask=True):
    """Pure-JAX reference mirroring the PyTorch forward (eval mode), full f32."""
    B, T, C = x.shape
    hp = lax.Precision.HIGHEST
    k = jnp.matmul(x, wk, precision=hp)
    q = jnp.matmul(x, wq, precision=hp)
    v = jnp.matmul(x, wv, precision=hp)
    wei = jnp.matmul(q, jnp.swapaxes(k, -2, -1), precision=hp) * (C ** -0.5)
    if mask:
        tril = jnp.tril(jnp.ones((T, T), dtype=jnp.float32))
        wei = jnp.where(tril == 0, -jnp.inf, wei)
    wei = jax.nn.softmax(wei, axis=-1)
    return jnp.matmul(wei, v, precision=hp)


if __name__ == "__main__":
    # cfg: n_embd=32, block_size=8, dropout=0.0 ; head_size=16 ; batch B=2
    B, T, C, H = 2, 8, 32, 16

    key = jax.random.PRNGKey(0)
    kx, kk, kq, kv = jax.random.split(key, 4)

    x = jax.random.normal(kx, (B, T, C), dtype=jnp.float32)
    # nn.Linear(C, H, bias=False) weight has shape (H, C); store transposed (C, H).
    wk = jax.random.normal(kk, (C, H), dtype=jnp.float32) * (C ** -0.5)
    wq = jax.random.normal(kq, (C, H), dtype=jnp.float32) * (C ** -0.5)
    wv = jax.random.normal(kv, (C, H), dtype=jnp.float32) * (C ** -0.5)

    ref = _reference(x, wk, wq, wv)

    # f32 MXU-operand path (precision=HIGHEST inside the kernel) — tight check.
    w_f32 = pack_head_weights(wk, wq, wv, n_embd=C, matmul_dtype=jnp.float32)
    out_f32 = jax.block_until_ready(head_forward(x, w_f32, head_size=H))
    assert out_f32.shape == (B, T, H)
    assert jnp.allclose(out_f32, ref, atol=2e-2, rtol=2e-2), "f32 path mismatch vs reference"

    # bf16 MXU-operand path (default packing; production dtype) — looser tolerance.
    w_bf16 = pack_head_weights(wk, wq, wv, n_embd=C)   # bf16 by default
    out_bf16 = jax.block_until_ready(head_forward(x, w_bf16, head_size=H))
    assert out_bf16.shape == (B, T, H)
    assert jnp.allclose(out_bf16, ref, atol=1e-1, rtol=5e-2), "bf16 path mismatch vs reference"

    print("KERNEL_OK")
</pallas_src>

<mosaic_0001>
module attributes {stable_mosaic.version = 11 : i64} {
  func.func @_head_kernel(%arg0: i32, %arg1: memref<1x8x32xf32, #tpu.memory_space<vmem>>, %arg2: memref<32x384xf32, #tpu.memory_space<vmem>>, %arg3: memref<1x8x128xf32, #tpu.memory_space<vmem>>) attributes {dimension_semantics = [#tpu.dimension_semantics<parallel>], iteration_bounds = array<i64: 2>, scalar_prefetch = 0 : i64, scratch_operands = 0 : i64, tpu.core_type = #tpu.core_type<tc>, window_params = [{transform_indices = @transform_0, window_bounds = array<i64: 1, 8, 32>}, {pipeline_mode = #tpu.pipeline_mode<synchronous>, transform_indices = @transform_1, window_bounds = array<i64: 32, 384>}, {transform_indices = @transform_2, window_bounds = array<i64: 1, 8, 128>}]} {
    %c0 = arith.constant 0 : index
    %c0_0 = arith.constant 0 : index
    %c0_1 = arith.constant 0 : index
    %0 = vector.load %arg1[%c0, %c0_0, %c0_1] : memref<1x8x32xf32, #tpu.memory_space<vmem>>, vector<1x8x32xf32>
    %1 = vector.shape_cast %0 : vector<1x8x32xf32> to vector<8x32xf32>
    %c0_2 = arith.constant 0 : index
    %c0_3 = arith.constant 0 : index
    %2 = vector.load %arg2[%c0_2, %c0_3] : memref<32x384xf32, #tpu.memory_space<vmem>>, vector<32x384xf32>
    %cst = arith.constant dense<0.000000e+00> : vector<8x384xf32>
    %3 = tpu.matmul %1, %2, %cst {dimension_numbers = #tpu.dot_dimension_numbers<[1], [0], [0], [1], [0, 0, 1, 1], [], []>, precision = #tpu.contract_precision<fp32>} : vector<8x32xf32>, vector<32x384xf32>, vector<8x384xf32> -> vector<8x384xf32>
    %4 = vector.extract_strided_slice %3 {offsets = [0, 0], sizes = [8, 128], strides = [1, 1]} : vector<8x384xf32> to vector<8x128xf32>
    %5 = vector.extract_strided_slice %3 {offsets = [0, 128], sizes = [8, 128], strides = [1, 1]} : vector<8x384xf32> to vector<8x128xf32>
    %6 = vector.extract_strided_slice %3 {offsets = [0, 256], sizes = [8, 128], strides = [1, 1]} : vector<8x384xf32> to vector<8x128xf32>
    %cst_4 = arith.constant dense<0.000000e+00> : vector<8x8xf32>
    %7 = tpu.matmul %5, %4, %cst_4 {dimension_numbers = #tpu.dot_dimension_numbers<[1], [1], [0], [0], [0, 0, 1, 0], [], []>, precision = #tpu.contract_precision<fp32>} : vector<8x128xf32>, vector<8x128xf32>, vector<8x8xf32> -> vector<8x8xf32>
    %8 = tpu.iota {dimensions = array<i32: 0>} : vector<8x8xi32>
    %9 = tpu.iota {dimensions = array<i32: 1>} : vector<8x8xi32>
    %10 = arith.cmpi sle, %9, %8 : vector<8x8xi32>
    %cst_5 = arith.constant -1.000000e+30 : f32
    %11 = vector.broadcast %cst_5 : f32 to vector<8x8xf32>
    %12 = arith.select %10, %7, %11 : vector<8x8xi1>, vector<8x8xf32>
    %cst_6 = arith.constant dense<0xFF800000> : vector<8xf32>
    %13 = vector.multi_reduction <maximumf>, %12, %cst_6 [1] : vector<8x8xf32> to vector<8xf32>
    %14 = vector.shape_cast %13 : vector<8xf32> to vector<8x1xf32>
    %15 = vector.broadcast %14 : vector<8x1xf32> to vector<8x8xf32>
    %16 = arith.subf %12, %15 : vector<8x8xf32>
    %17 = math.exp %16 : vector<8x8xf32>
    %cst_7 = arith.constant dense<0.000000e+00> : vector<8xf32>
    %18 = vector.multi_reduction <add>, %17, %cst_7 [1] : vector<8x8xf32> to vector<8xf32>
    %19 = vector.shape_cast %18 : vector<8xf32> to vector<8x1xf32>
    %20 = vector.broadcast %19 : vector<8x1xf32> to vector<8x8xf32>
    %21 = arith.divf %17, %20 : vector<8x8xf32>
    %cst_8 = arith.constant dense<0.000000e+00> : vector<8x128xf32>
    %22 = tpu.matmul %21, %6, %cst_8 {dimension_numbers = #tpu.dot_dimension_numbers<[1], [0], [0], [1], [0, 0, 1, 1], [], []>, precision = #tpu.contract_precision<fp32>} : vector<8x8xf32>, vector<8x128xf32>, vector<8x128xf32> -> vector<8x128xf32>
    %c0_9 = arith.constant 0 : index
    %c0_10 = arith.constant 0 : index
    %c0_11 = arith.constant 0 : index
    %23 = vector.load %arg3[%c0_9, %c0_10, %c0_11] : memref<1x8x128xf32, #tpu.memory_space<vmem>>, vector<1x8x128xf32>
    %24 = vector.shape_cast %23 : vector<1x8x128xf32> to vector<8x128xf32>
    %25 = vector.shape_cast %22 : vector<8x128xf32> to vector<1x8x128xf32>
    tpu.vector_store %arg3[%c0_9, %c0_10, %c0_11], %25 {strides = array<i32>} : memref<1x8x128xf32, #tpu.memory_space<vmem>>, vector<1x8x128xf32>,
    return
  }
  func.func @transform_0(%arg0: i32) -> (i32, i32, i32) {
    %c0_i32 = arith.constant 0 : i32
    %c0_i32_0 = arith.constant 0 : i32
    %c0_i32_1 = arith.constant 0 : i32
    return %arg0, %c0_i32, %c0_i32_0 : i32, i32, i32
  }
  func.func @transform_1(%arg0: i32) -> (i32, i32) {
    %c0_i32 = arith.constant 0 : i32
    %c0_i32_0 = arith.constant 0 : i32
    %c0_i32_1 = arith.constant 0 : i32
    return %c0_i32, %c0_i32_0 : i32, i32
  }
  func.func @transform_2(%arg0: i32) -> (i32, i32, i32) {
    %c0_i32 = arith.constant 0 : i32
    %c0_i32_0 = arith.constant 0 : i32
    %c0_i32_1 = arith.constant 0 : i32
    return %arg0, %c0_i32, %c0_i32_0 : i32, i32, i32
  }
}

</mosaic_0001>

<llo_original>
// kernel: head_forward.1
$region0: #{head_forward.1}
  #allocation0 [shape = 'u32[]', space=smem, size = 0x4, offset = 0x4, fixed_abs, tag = 'smem constant byte address 0x4 - core index']
  #allocation1 [shape = 'u32[144,128]{1,0:T(1,128)}', space=vmem, size = 0x12000, scoped, tag = 'internal scratch']
  %s0 = inlined_call_operand.hbm [shape: f32[2,8,32], index: 0, kind: input, shape index: {}]
  %s1 = inlined_call_operand.hbm [shape: f32[32,384], index: 1, kind: input, shape index: {}]
  %s2 = inlined_call_operand.hbm [shape: f32[2,8,128], index: 2, kind: output, shape index: {}]
  %s3 = sld [smem:[#allocation0]]
  $region49: #{head_forward.1} parent=0
    _
  %s5 = ssub.s32 1, %s3
  %s6 = scalar_select 0, %s5, %s3
  $region1: #{head_forward.1} parent=0
    #allocation2 [shape = 'u8[8192]{0}', space=vmem, size = 0x2000, scoped, tag = 'input window, operand 0']
    #allocation3 [shape = 's32[2]{0}', space=sflag, size = 0x8, scoped, tag = 'scoped memory for head_forward.1']
    #allocation4 [shape = 's32[2]{0}', space=sflag, size = 0x8, scoped, tag = 'scoped memory for head_forward.1']
    #allocation5 [shape = 'u8[49152]{0}', space=vmem, size = 0xc000, scoped, tag = 'input window, operand 1, single buffered']
    #allocation6 [shape = 's32[1]{0}', space=sflag, size = 0x4, scoped, tag = 'scoped memory for head_forward.1']
    #allocation7 [shape = 'u8[8192]{0}', space=vmem, size = 0x2000, scoped, tag = 'output window, operand 0']
    %7 = vsyncpa [#allocation3], 0
    %s8 = scalar_lea.sflag [#allocation3], 1
    %9 = vsyncpa %s8, 0
    %10 = vsyncpa [#allocation6], 0
    %11 = vsyncpa [#allocation4], 0
    %s12 = scalar_lea.sflag [#allocation4], 1
    %13 = vsyncpa %s12, 0
    loop: start=0, step=1, limit=4
    $region2: #{head_forward.1} parent=1 // loop_pre_header
      _
    $region3: #{head_forward.1} parent=1 // loop_header
      %s15 = sphi 0, %s19
      %p16 = scmp.ge.s32.totalorder %s15, 4
      %s25 = sphi 0, %s27
      %s28 = sphi 0, %s25
      %s29 = sphi 0, %s28
      %s45 = sphi 0, %s29
      %s49 = sphi 0, %s49
      %s51 = sphi 0, %s49
      %s52 = sphi 0, %s51
      %s66 = sphi 0, %s52
      %s72 = sphi 0, %s74
      %s75 = sphi 0, %s72
      %s76 = sphi 0, %s75
      %s92 = sphi 0, %s76
    $region4: #{head_forward.1} parent=1 // loop_header_branch
      %18 = sbr.rel (%p16) target = $region8
    $region5: #{head_forward.1} parent=1 // loop_body
      %s20 = ssub.s32 %s15, 1
      %s21 = ssub.s32 %s15, 2
      %s22 = sadd.s32 %s15, 1
      %s23 = ssub.s32 %s15, %s22
      %p24 = scmp.eq.s32.totalorder %s23, 0
      %s26 = sadd.s32 %s25, 1
      %s27 = scalar_select %p24, %s25, %s26
      %p30 = pneg %p24
      %p31 = scmp.eq.s32.totalorder %s15, 1
      %p32 = por %p30, %p31
      %p33 = scmp.ne.s32.totalorder %s25, %s28
      %p34 = scmp.eq.s32.totalorder %s15, 0
      %p35 = por %p33, %p34
      %p36 = scmp.ne.s32.totalorder %s25, %s28
      %p37 = scmp.eq.s32.totalorder %s20, 1
      %p38 = por %p36, %p37
      %p39 = scmp.ne.s32.totalorder %s28, %s29
      %p40 = scmp.eq.s32.totalorder %s20, 0
      %p41 = por %p39, %p40
      %p42 = scmp.ne.s32.totalorder %s28, %s29
      %p43 = scmp.eq.s32.totalorder %s21, 1
      %p44 = por %p42, %p43
      %p46 = scmp.ne.s32.totalorder %s29, %s45
      %p47 = scmp.eq.s32.totalorder %s21, 0
      %p48 = por %p46, %p47
      %s50 = sadd.s32 %s49, 1
      %p53 = scmp.eq.s32.totalorder %s15, 1
      %p54 = scmp.ne.s32.totalorder %s49, %s51
      %p55 = scmp.eq.s32.totalorder %s15, 0
      %p56 = por %p54, %p55
      %p57 = scmp.ne.s32.totalorder %s49, %s51
      %p58 = scmp.eq.s32.totalorder %s20, 1
      %p59 = por %p57, %p58
      %p60 = scmp.ne.s32.totalorder %s51, %s52
      %p61 = scmp.eq.s32.totalorder %s20, 0
      %p62 = por %p60, %p61
      %p63 = scmp.ne.s32.totalorder %s51, %s52
      %p64 = scmp.eq.s32.totalorder %s21, 1
      %p65 = por %p63, %p64
      %p67 = scmp.ne.s32.totalorder %s52, %s66
      %p68 = scmp.eq.s32.totalorder %s21, 0
      %p69 = por %p67, %p68
      %s70 = ssub.s32 %s15, %s22
      %p71 = scmp.eq.s32.totalorder %s70, 0
      %s73 = sadd.s32 %s72, 1
      %s74 = scalar_select %p71, %s72, %s73
      %p77 = pneg %p71
      %p78 = scmp.eq.s32.totalorder %s15, 1
      %p79 = por %p77, %p78
      %p80 = scmp.ne.s32.totalorder %s72, %s75
      %p81 = scmp.eq.s32.totalorder %s15, 0
      %p82 = por %p80, %p81
      %p83 = scmp.ne.s32.totalorder %s72, %s75
      %p84 = scmp.eq.s32.totalorder %s20, 1
      %p85 = por %p83, %p84
      %p86 = scmp.ne.s32.totalorder %s75, %s76
      %p87 = scmp.eq.s32.totalorder %s20, 0
      %p88 = por %p86, %p87
      %p89 = scmp.ne.s32.totalorder %s75, %s76
      %p90 = scmp.eq.s32.totalorder %s21, 1
      %p91 = por %p89, %p90
      %p93 = scmp.ne.s32.totalorder %s76, %s92
      %p94 = scmp.eq.s32.totalorder %s21, 0
      %p95 = por %p93, %p94
      %p96 = scmp.le.s32.totalorder 1, %s15
      %p97 = scmp.lt.s32.totalorder %s15, 3
      %p98 = pnand %p96, %p97
      %p99 = pneg %p98
      // Predicated region
      $region9: #{head_forward.1} parent=5 // pred_check
        _
      $region10: #{head_forward.1} parent=5 // pred_check_branch
        %101 = sbr.rel (%p98) target = $region12
      $region11: #{head_forward.1} parent=5 // pred_region
        %s102 = ssub.s32 %s15, 1
        // Predicated region
        $region13: #{head_forward.1} parent=11 // pred_check
          %p103 = pneg %p62
        $region14: #{head_forward.1} parent=11 // pred_check_branch
          %105 = sbr.rel (%p103) target = $region16
        $region15: #{head_forward.1} parent=11 // pred_region
          %s107 = ssub.s32 1536, 1536
          %108 = vsyncadd [#allocation6], %s107
          %s109 = sshll.u32 [#allocation5], 4
          %s110 = int_to_ptr.vmem [resolvable:$true] %s109
          %115 = dma.hbm_to_vmem [thread:$0]  %s1, 1536, %s110, [#allocation6], 384, 384, 24
        $region16: #{head_forward.1} parent=11 // pred_fallthru
          _
      $region12: #{head_forward.1} parent=5 // pred_fallthru
        _
      %p116 = scmp.lt.s32.totalorder %s15, 2
      // Predicated region
      $region17: #{head_forward.1} parent=5 // pred_check
        %p117 = pneg %p116
      $region18: #{head_forward.1} parent=5 // pred_check_branch
        %119 = sbr.rel (%p117) target = $region20
      $region19: #{head_forward.1} parent=5 // pred_region
        // Predicated region
        $region21: #{head_forward.1} parent=19 // pred_check
          %p120 = pneg %p35
        $region22: #{head_forward.1} parent=19 // pred_check_branch
          %122 = sbr.rel (%p120) target = $region24
        $region23: #{head_forward.1} parent=19 // pred_region
          %s123 = sand.u32 %s25, 1
          %s124 = scalar_lea.sflag [#allocation3], %s123
          %s125 = sand.u32 %s25, 1
          %s126 = smul.addr %s125, 8
          %s127 = scalar_lea.vmem [#allocation2], %s126
          %s129 = ssub.s32 128, 128
          %130 = vsyncadd %s124, %s129
          %s131 = smul.addr %s15, 128
          %s132 = scalar_lea.hbm %s0, %s131
          %s134 = sshll.u32 %s127, 4
          %s135 = int_to_ptr.vmem [resolvable:$true] %s134
          %137 = dma.hbm_to_vmem [thread:$0]  %s132, 128, %s135, %s124
        $region24: #{head_forward.1} parent=19 // pred_fallthru
          _
      $region20: #{head_forward.1} parent=5 // pred_fallthru
        _
      %p138 = scmp.le.s32.totalorder 1, %s15
      %p139 = scmp.lt.s32.totalorder %s15, 3
      %p140 = pnand %p138, %p139
      %p141 = pneg %p140
      // Predicated region
      $region25: #{head_forward.1} parent=5 // pred_check
        _
      $region26: #{head_forward.1} parent=5 // pred_check_branch
        %143 = sbr.rel (%p140) target = $region28
      $region27: #{head_forward.1} parent=5 // pred_region
        %s144 = ssub.s32 %s15, 1
        %s145 = sand.u32 %s28, 1
        %s146 = scalar_lea.sflag [#allocation3], %s145
        %s147 = sand.u32 %s28, 1
        %s148 = smul.addr %s147, 8
        %s149 = scalar_lea.vmem [#allocation2], %s148
        // Predicated region
        $region29: #{head_forward.1} parent=27 // pred_check
          %p150 = pneg %p41
        $region30: #{head_forward.1} parent=27 // pred_check_branch
          %152 = sbr.rel (%p150) target = $region32
        $region31: #{head_forward.1} parent=27 // pred_region
          %153 = dma.done %s146, 128
        $region32: #{head_forward.1} parent=27 // pred_fallthru
          _
        // Predicated region
        $region33: #{head_forward.1} parent=27 // pred_check
          %p154 = pneg %p62
        $region34: #{head_forward.1} parent=27 // pred_check_branch
          %156 = sbr.rel (%p154) target = $region36
        $region35: #{head_forward.1} parent=27 // pred_region
          %157 = dma.done [#allocation6], 1536
        $region36: #{head_forward.1} parent=27 // pred_fallthru
          _
        %s158 = sand.u32 %s28, 1
        %s159 = scalar_lea.sflag [#allocation3], %s158
        %s160 = sand.u32 %s28, 1
        %s161 = smul.addr %s160, 8
        %s162 = scalar_lea.vmem [#allocation2], %s161
        %p163 = pneg %p41
        %p164 = pneg %p38
        %p165 = pneg %p62
        %p166 = pneg %p59
        %p167 = pneg %p88
        %p168 = pneg %p85
        %s169 = sand.u32 %s75, 1
        %s170 = scalar_lea.sflag [#allocation4], %s169
        %s171 = sand.u32 %s75, 1
        %s172 = smul.addr %s171, 8
        %s173 = scalar_lea.vmem [#allocation7], %s172
        %v174 = vld [vmem:[%s149] sm:$0xff]
        %v175 = vld [vmem:[#allocation5] sm:$0xff]
        %v176 = vld [vmem:[#allocation5 + $0x8] sm:$0xff]
        %v177 = vld [vmem:[#allocation5 + $0x10] sm:$0xff]
        %v178 = vld [vmem:[#allocation5 + $0x18] sm:$0xff]
        %v179 = vld [vmem:[#allocation5 + $0x20] sm:$0xff]
        %v180 = vld [vmem:[#allocation5 + $0x28] sm:$0xff]
        %v181 = vld [vmem:[#allocation5 + $0x30] sm:$0xff]
        %v182 = vld [vmem:[#allocation5 + $0x38] sm:$0xff]
        %v183 = vld [vmem:[#allocation5 + $0x40] sm:$0xff]
        %v184 = vld [vmem:[#allocation5 + $0x48] sm:$0xff]
        %v185 = vld [vmem:[#allocation5 + $0x50] sm:$0xff]
        %v186 = vld [vmem:[#allocation5 + $0x58] sm:$0xff]
        %vm187 = vcmask 261120
        %v189 = vsel %vm187, %v174, 0
        %v191 = vand.u32 %v176, 4294901760
        %192 = vmatprep.subr.mxu0 %v191
        %v193 = vand.u32 %v175, 4294901760
        %194 = vmatpush1.msra.mxu0 %v193
        %v195 = vand.u32 %v179, 4294901760
        %196 = vmatprep.subr.mxu0 %v195
        %v197 = vand.u32 %v178, 4294901760
        %198 = vmatpush1.msra.mxu0 %v197
        %v199 = vand.u32 %v182, 4294901760
        %200 = vmatprep.subr.mxu0 %v199
        %v201 = vand.u32 %v181, 4294901760
        %202 = vmatpush1.msra.mxu0 %v201
        %v203 = vand.u32 %v185, 4294901760
        %204 = vmatprep.subr.mxu0 %v203
        %v205 = vand.u32 %v184, 4294901760
        %206 = vmatpush1.msra.mxu0 %v205
        %207 = vmatprep.subr.mxu0 0.0
        %208 = vmatpush1.msra.mxu0 0.0
        %209 = vmatprep.subr.mxu0 0.0
        %210 = vmatpush1.msra.mxu0 0.0
        %211 = vmatprep.subr.mxu0 0.0
        %212 = vmatpush1.msra.mxu0 0.0
        %213 = vmatprep.subr.mxu0 0.0
        %214 = vmatpush1.msra.mxu0 0.0
        %215 = vmatprep.subr.mxu0 0.0
        %216 = vmatpush1.msra.mxu0 0.0
        %217 = vmatprep.subr.mxu0 0.0
        %218 = vmatpush1.msra.mxu0 0.0
        %219 = vmatprep.subr.mxu0 0.0
        %220 = vmatpush1.msra.mxu0 0.0
        %221 = vmatprep.subr.mxu0 0.0
        %222 = vmatpush1.msra.mxu0 0.0
        %223 = vmatprep.subr.mxu0 0.0
        %224 = vmatpush1.msra.mxu0 0.0
        %225 = vmatprep.subr.mxu0 0.0
        %226 = vmatpush1.msra.mxu0 0.0
        %227 = vmatprep.subr.mxu0 0.0
        %228 = vmatpush1.msra.mxu0 0.0
        %229 = vmatprep.subr.mxu0 0.0
        %230 = vmatpush1.msra.mxu0 0.0
        %231 = vmatprep.subr.mxu0 0.0
        %232 = vmatpush1.msra.mxu0 0.0
        %233 = vmatprep.subr.mxu0 0.0
        %234 = vmatpush1.msra.mxu0 0.0
        %235 = vmatprep.subr.mxu0 0.0
        %236 = vmatpush1.msra.mxu0 0.0
        %237 = vmatprep.subr.mxu0 0.0
        %238 = vmatpush1.msra.mxu0 0.0
        %239 = vmatprep.subr.mxu0 0.0
        %240 = vmatpush1.msra.mxu0 0.0
        %241 = vmatprep.subr.mxu0 0.0
        %242 = vmatpush1.msra.mxu0 0.0
        %243 = vmatprep.subr.mxu0 0.0
        %244 = vmatpush1.msra.mxu0 0.0
        %245 = vmatprep.subr.mxu0 0.0
        %246 = vmatpush1.msra.mxu0 0.0
        %247 = vmatprep.subr.mxu0 0.0
        %248 = vmatpush1.msra.mxu0 0.0
        %249 = vmatprep.subr.mxu0 0.0
        %250 = vmatpush1.msra.mxu0 0.0
        %251 = vmatprep.subr.mxu0 0.0
        %252 = vmatpush1.msra.mxu0 0.0
        %253 = vmatprep.subr.mxu0 0.0
        %254 = vmatpush1.msra.mxu0 0.0
        %255 = vmatprep.subr.mxu0 0.0
        %256 = vmatpush1.msra.mxu0 0.0
        %257 = vmatprep.subr.mxu0 0.0
        %258 = vmatpush1.msra.mxu0 0.0
        %259 = vmatprep.subr.mxu0 0.0
        %260 = vmatpush1.msra.mxu0 0.0
        %261 = vmatprep.subr.mxu0 0.0
        %262 = vmatpush1.msra.mxu0 0.0
        %263 = vmatprep.mubr.f32.mxu0 0.0
        %v264 = vand.u32 %v189, 4294901760
        %v265 = vsub.f32 %v189, %v264
        %v266 = vand.u32 %v265, 4294901760
        %v267 = vsub.f32 %v265, %v266
        %v268 = vand.u32 %v267, 4294901760
        %269 = vmatmul.mubr.f32.gmra.mrb[0].mxu0 %v268
        %v270 = vpop.f32.mrb[0].mxu0
        %v271 = vadd.f32 0.0, %v270
        %v272 = vpop.f32.mrb[0].mxu0
        %v273 = vadd.f32 0.0, %v272
        %274 = vdwg.mxu0
        %v275 = vand.u32 %v176, 4294901760
        %v276 = vsub.f32 %v176, %v275
        %v277 = vand.u32 %v276, 4294901760
        %v278 = vsub.f32 %v276, %v277
        %v279 = vand.u32 %v278, 4294901760
        %280 = vmatprep.subr.mxu0 %v279
        %v281 = vand.u32 %v175, 4294901760
        %v282 = vsub.f32 %v175, %v281
        %v283 = vand.u32 %v282, 4294901760
        %v284 = vsub.f32 %v282, %v283
        %v285 = vand.u32 %v284, 4294901760
        %286 = vmatpush1.msra.mxu0 %v285
        %v287 = vand.u32 %v179, 4294901760
        %v288 = vsub.f32 %v179, %v287
        %v289 = vand.u32 %v288, 4294901760
        %v290 = vsub.f32 %v288, %v289
        %v291 = vand.u32 %v290, 4294901760
        %292 = vmatprep.subr.mxu0 %v291
        %v293 = vand.u32 %v178, 4294901760
        %v294 = vsub.f32 %v178, %v293
        %v295 = vand.u32 %v294, 4294901760
        %v296 = vsub.f32 %v294, %v295
        %v297 = vand.u32 %v296, 4294901760
        %298 = vmatpush1.msra.mxu0 %v297
        %v299 = vand.u32 %v182, 4294901760
        %v300 = vsub.f32 %v182, %v299
        %v301 = vand.u32 %v300, 4294901760
        %v302 = vsub.f32 %v300, %v301
        %v303 = vand.u32 %v302, 4294901760
        %304 = vmatprep.subr.mxu0 %v303
        %v305 = vand.u32 %v181, 4294901760
        %v306 = vsub.f32 %v181, %v305
        %v307 = vand.u32 %v306, 4294901760
        %v308 = vsub.f32 %v306, %v307
        %v309 = vand.u32 %v308, 4294901760
        %310 = vmatpush1.msra.mxu0 %v309
        %v311 = vand.u32 %v185, 4294901760
        %v312 = vsub.f32 %v185, %v311
        %v313 = vand.u32 %v312, 4294901760
        %v314 = vsub.f32 %v312, %v313
        %v315 = vand.u32 %v314, 4294901760
        %316 = vmatprep.subr.mxu0 %v315
        %v317 = vand.u32 %v184, 4294901760
        %v318 = vsub.f32 %v184, %v317
        %v319 = vand.u32 %v318, 4294901760
        %v320 = vsub.f32 %v318, %v319
        %v321 = vand.u32 %v320, 4294901760
        %322 = vmatpush1.msra.mxu0 %v321
        %323 = vmatprep.subr.mxu0 0.0
        %324 = vmatpush1.msra.mxu0 0.0
        %325 = vmatprep.subr.mxu0 0.0
        %326 = vmatpush1.msra.mxu0 0.0
        %327 = vmatprep.subr.mxu0 0.0
        %328 = vmatpush1.msra.mxu0 0.0
        %329 = vmatprep.subr.mxu0 0.0
        %330 = vmatpush1.msra.mxu0 0.0
        %331 = vmatprep.subr.mxu0 0.0
        %332 = vmatpush1.msra.mxu0 0.0
        %333 = vmatprep.subr.mxu0 0.0
        %334 = vmatpush1.msra.mxu0 0.0
        %335 = vmatprep.subr.mxu0 0.0
        %336 = vmatpush1.msra.mxu0 0.0
        %337 = vmatprep.subr.mxu0 0.0
        %338 = vmatpush1.msra.mxu0 0.0
        %339 = vmatprep.subr.mxu0 0.0
        %340 = vmatpush1.msra.mxu0 0.0
        %341 = vmatprep.subr.mxu0 0.0
        %342 = vmatpush1.msra.mxu0 0.0
        %343 = vmatprep.subr.mxu0 0.0
        %344 = vmatpush1.msra.mxu0 0.0
        %345 = vmatprep.subr.mxu0 0.0
        %346 = vmatpush1.msra.mxu0 0.0
        %347 = vmatprep.subr.mxu0 0.0
        %348 = vmatpush1.msra.mxu0 0.0
        %349 = vmatprep.subr.mxu0 0.0
        %350 = vmatpush1.msra.mxu0 0.0
        %351 = vmatprep.subr.mxu0 0.0
        %352 = vmatpush1.msra.mxu0 0.0
        %353 = vmatprep.subr.mxu0 0.0
        %354 = vmatpush1.msra.mxu0 0.0
        %355 = vmatprep.subr.mxu0 0.0
        %356 = vmatpush1.msra.mxu0 0.0
        %357 = vmatprep.subr.mxu0 0.0
        %358 = vmatpush1.msra.mxu0 0.0
        %359 = vmatprep.subr.mxu0 0.0
        %360 = vmatpush1.msra.mxu0 0.0
        %361 = vmatprep.subr.mxu0 0.0
        %362 = vmatpush1.msra.mxu0 0.0
        %363 = vmatprep.subr.mxu0 0.0
        %364 = vmatpush1.msra.mxu0 0.0
        %365 = vmatprep.subr.mxu0 0.0
        %366 = vmatpush1.msra.mxu0 0.0
        %367 = vmatprep.subr.mxu0 0.0
        %368 = vmatpush1.msra.mxu0 0.0
        %369 = vmatprep.subr.mxu0 0.0
        %370 = vmatpush1.msra.mxu0 0.0
        %371 = vmatprep.subr.mxu0 0.0
        %372 = vmatpush1.msra.mxu0 0.0
        %373 = vmatprep.subr.mxu0 0.0
        %374 = vmatpush1.msra.mxu0 0.0
        %375 = vmatprep.subr.mxu0 0.0
        %376 = vmatpush1.msra.mxu0 0.0
        %377 = vmatprep.subr.mxu0 0.0
        %378 = vmatpush1.msra.mxu0 0.0
        %379 = vmatprep.mubr.f32.mxu0 0.0
        %v380 = vand.u32 %v189, 4294901760
        %381 = vmatmul.mubr.f32.gmra.mrb[0].mxu0 %v380
        %v382 = vpop.f32.mrb[0].mxu0
        %v383 = vadd.f32 %v271, %v382
        %v384 = vpop.f32.mrb[0].mxu0
        %v385 = vadd.f32 %v273, %v384
        %386 = vdwg.mxu0
        %v387 = vand.u32 %v176, 4294901760
        %v388 = vsub.f32 %v176, %v387
        %389 = vmatprep.subr.mxu0 %v388
        %v390 = vand.u32 %v175, 4294901760
        %v391 = vsub.f32 %v175, %v390
        %392 = vmatpush1.msra.mxu0 %v391
        %v393 = vand.u32 %v179, 4294901760
        %v394 = vsub.f32 %v179, %v393
        %395 = vmatprep.subr.mxu0 %v394
        %v396 = vand.u32 %v178, 4294901760
        %v397 = vsub.f32 %v178, %v396
        %398 = vmatpush1.msra.mxu0 %v397
        %v399 = vand.u32 %v182, 4294901760
        %v400 = vsub.f32 %v182, %v399
        %401 = vmatprep.subr.mxu0 %v400
        %v402 = vand.u32 %v181, 4294901760
        %v403 = vsub.f32 %v181, %v402
        %404 = vmatpush1.msra.mxu0 %v403
        %v405 = vand.u32 %v185, 4294901760
        %v406 = vsub.f32 %v185, %v405
        %407 = vmatprep.subr.mxu0 %v406
        %v408 = vand.u32 %v184, 4294901760
        %v409 = vsub.f32 %v184, %v408
        %410 = vmatpush1.msra.mxu0 %v409
        %411 = vmatprep.subr.mxu0 0.0
        %412 = vmatpush1.msra.mxu0 0.0
        %413 = vmatprep.subr.mxu0 0.0
        %414 = vmatpush1.msra.mxu0 0.0
        %415 = vmatprep.subr.mxu0 0.0
        %416 = vmatpush1.msra.mxu0 0.0
        %417 = vmatprep.subr.mxu0 0.0
        %418 = vmatpush1.msra.mxu0 0.0
        %419 = vmatprep.subr.mxu0 0.0
        %420 = vmatpush1.msra.mxu0 0.0
        %421 = vmatprep.subr.mxu0 0.0
        %422 = vmatpush1.msra.mxu0 0.0
        %423 = vmatprep.subr.mxu0 0.0
        %424 = vmatpush1.msra.mxu0 0.0
        %425 = vmatprep.subr.mxu0 0.0
        %426 = vmatpush1.msra.mxu0 0.0
        %427 = vmatprep.subr.mxu0 0.0
        %428 = vmatpush1.msra.mxu0 0.0
        %429 = vmatprep.subr.mxu0 0.0
        %430 = vmatpush1.msra.mxu0 0.0
        %431 = vmatprep.subr.mxu0 0.0
        %432 = vmatpush1.msra.mxu0 0.0
        %433 = vmatprep.subr.mxu0 0.0
        %434 = vmatpush1.msra.mxu0 0.0
        %435 = vmatprep.subr.mxu0 0.0
        %436 = vmatpush1.msra.mxu0 0.0
        %437 = vmatprep.subr.mxu0 0.0
        %438 = vmatpush1.msra.mxu0 0.0
        %439 = vmatprep.subr.mxu0 0.0
        %440 = vmatpush1.msra.mxu0 0.0
        %441 = vmatprep.subr.mxu0 0.0
        %442 = vmatpush1.msra.mxu0 0.0
        %443 = vmatprep.subr.mxu0 0.0
        %444 = vmatpush1.msra.mxu0 0.0
        %445 = vmatprep.subr.mxu0 0.0
        %446 = vmatpush1.msra.mxu0 0.0
        %447 = vmatprep.subr.mxu0 0.0
        %448 = vmatpush1.msra.mxu0 0.0
        %449 = vmatprep.subr.mxu0 0.0
        %450 = vmatpush1.msra.mxu0 0.0
        %451 = vmatprep.subr.mxu0 0.0
        %452 = vmatpush1.msra.mxu0 0.0
        %453 = vmatprep.subr.mxu0 0.0
        %454 = vmatpush1.msra.mxu0 0.0
        %455 = vmatprep.subr.mxu0 0.0
        %456 = vmatpush1.msra.mxu0 0.0
        %457 = vmatprep.subr.mxu0 0.0
        %458 = vmatpush1.msra.mxu0 0.0
        %459 = vmatprep.subr.mxu0 0.0
        %460 = vmatpush1.msra.mxu0 0.0
        %461 = vmatprep.subr.mxu0 0.0
        %462 = vmatpush1.msra.mxu0 0.0
        %463 = vmatprep.subr.mxu0 0.0
        %464 = vmatpush1.msra.mxu0 0.0
        %465 = vmatprep.subr.mxu0 0.0
        %466 = vmatpush1.msra.mxu0 0.0
        %467 = vmatprep.mubr.f32.mxu0 0.0
        %v468 = vand.u32 %v189, 4294901760
        %v469 = vsub.f32 %v189, %v468
        %470 = vmatmul.mubr.f32.gmra.mrb[0].mxu0 %v469
        %v471 = vpop.f32.mrb[0].mxu0
        %v472 = vadd.f32 %v383, %v471
        %v473 = vpop.f32.mrb[0].mxu0
        %v474 = vadd.f32 %v385, %v473
        %475 = vdwg.mxu0
        %v476 = vand.u32 %v176, 4294901760
        %477 = vmatprep.subr.mxu0 %v476
        %v478 = vand.u32 %v175, 4294901760
        %479 = vmatpush1.msra.mxu0 %v478
        %v480 = vand.u32 %v179, 4294901760
        %481 = vmatprep.subr.mxu0 %v480
        %v482 = vand.u32 %v178, 4294901760
        %483 = vmatpush1.msra.mxu0 %v482
        %v484 = vand.u32 %v182, 4294901760
        %485 = vmatprep.subr.mxu0 %v484
        %v486 = vand.u32 %v181, 4294901760
        %487 = vmatpush1.msra.mxu0 %v486
        %v488 = vand.u32 %v185, 4294901760
        %489 = vmatprep.subr.mxu0 %v488
        %v490 = vand.u32 %v184, 4294901760
        %491 = vmatpush1.msra.mxu0 %v490
        %492 = vmatprep.subr.mxu0 0.0
        %493 = vmatpush1.msra.mxu0 0.0
        %494 = vmatprep.subr.mxu0 0.0
        %495 = vmatpush1.msra.mxu0 0.0
        %496 = vmatprep.subr.mxu0 0.0
        %497 = vmatpush1.msra.mxu0 0.0
        %498 = vmatprep.subr.mxu0 0.0
        %499 = vmatpush1.msra.mxu0 0.0
        %500 = vmatprep.subr.mxu0 0.0
        %501 = vmatpush1.msra.mxu0 0.0
        %502 = vmatprep.subr.mxu0 0.0
        %503 = vmatpush1.msra.mxu0 0.0
        %504 = vmatprep.subr.mxu0 0.0
        %505 = vmatpush1.msra.mxu0 0.0
        %506 = vmatprep.subr.mxu0 0.0
        %507 = vmatpush1.msra.mxu0 0.0
        %508 = vmatprep.subr.mxu0 0.0
        %509 = vmatpush1.msra.mxu0 0.0
        %510 = vmatprep.subr.mxu0 0.0
        %511 = vmatpush1.msra.mxu0 0.0
        %512 = vmatprep.subr.mxu0 0.0
        %513 = vmatpush1.msra.mxu0 0.0
        %514 = vmatprep.subr.mxu0 0.0
        %515 = vmatpush1.msra.mxu0 0.0
        %516 = vmatprep.subr.mxu0 0.0
        %517 = vmatpush1.msra.mxu0 0.0
        %518 = vmatprep.subr.mxu0 0.0
        %519 = vmatpush1.msra.mxu0 0.0
        %520 = vmatprep.subr.mxu0 0.0
        %521 = vmatpush1.msra.mxu0 0.0
        %522 = vmatprep.subr.mxu0 0.0
        %523 = vmatpush1.msra.mxu0 0.0
        %524 = vmatprep.subr.mxu0 0.0
        %525 = vmatpush1.msra.mxu0 0.0
        %526 = vmatprep.subr.mxu0 0.0
        %527 = vmatpush1.msra.mxu0 0.0
        %528 = vmatprep.subr.mxu0 0.0
        %529 = vmatpush1.msra.mxu0 0.0
        %530 = vmatprep.subr.mxu0 0.0
        %531 = vmatpush1.msra.mxu0 0.0
        %532 = vmatprep.subr.mxu0 0.0
        %533 = vmatpush1.msra.mxu0 0.0
        %534 = vmatprep.subr.mxu0 0.0
        %535 = vmatpush1.msra.mxu0 0.0
        %536 = vmatprep.subr.mxu0 0.0
        %537 = vmatpush1.msra.mxu0 0.0
        %538 = vmatprep.subr.mxu0 0.0
        %539 = vmatpush1.msra.mxu0 0.0
        %540 = vmatprep.subr.mxu0 0.0
        %541 = vmatpush1.msra.mxu0 0.0
        %542 = vmatprep.subr.mxu0 0.0
        %543 = vmatpush1.msra.mxu0 0.0
        %544 = vmatprep.subr.mxu0 0.0
        %545 = vmatpush1.msra.mxu0 0.0
        %546 = vmatprep.subr.mxu0 0.0
        %547 = vmatpush1.msra.mxu0 0.0
        %548 = vmatprep.mubr.f32.mxu0 0.0
        %v549 = vand.u32 %v189, 4294901760
        %v550 = vsub.f32 %v189, %v549
        %v551 = vand.u32 %v550, 4294901760
        %552 = vmatmul.mubr.f32.gmra.mrb[0].mxu0 %v551
        %v553 = vpop.f32.mrb[0].mxu0
        %v554 = vadd.f32 %v472, %v553
        %v555 = vpop.f32.mrb[0].mxu0
        %v556 = vadd.f32 %v474, %v555
        %557 = vdwg.mxu0
        %v558 = vand.u32 %v176, 4294901760
        %v559 = vsub.f32 %v176, %v558
        %v560 = vand.u32 %v559, 4294901760
        %561 = vmatprep.subr.mxu0 %v560
        %v562 = vand.u32 %v175, 4294901760
        %v563 = vsub.f32 %v175, %v562
        %v564 = vand.u32 %v563, 4294901760
        %565 = vmatpush1.msra.mxu0 %v564
        %v566 = vand.u32 %v179, 4294901760
        %v567 = vsub.f32 %v179, %v566
        %v568 = vand.u32 %v567, 4294901760
        %569 = vmatprep.subr.mxu0 %v568
        %v570 = vand.u32 %v178, 4294901760
        %v571 = vsub.f32 %v178, %v570
        %v572 = vand.u32 %v571, 4294901760
        %573 = vmatpush1.msra.mxu0 %v572
        %v574 = vand.u32 %v182, 4294901760
        %v575 = vsub.f32 %v182, %v574
        %v576 = vand.u32 %v575, 4294901760
        %577 = vmatprep.subr.mxu0 %v576
        %v578 = vand.u32 %v181, 4294901760
        %v579 = vsub.f32 %v181, %v578
        %v580 = vand.u32 %v579, 4294901760
        %581 = vmatpush1.msra.mxu0 %v580
        %v582 = vand.u32 %v185, 4294901760
        %v583 = vsub.f32 %v185, %v582
        %v584 = vand.u32 %v583, 4294901760
        %585 = vmatprep.subr.mxu0 %v584
        %v586 = vand.u32 %v184, 4294901760
        %v587 = vsub.f32 %v184, %v586
        %v588 = vand.u32 %v587, 4294901760
        %589 = vmatpush1.msra.mxu0 %v588
        %590 = vmatprep.subr.mxu0 0.0
        %591 = vmatpush1.msra.mxu0 0.0
        %592 = vmatprep.subr.mxu0 0.0
        %593 = vmatpush1.msra.mxu0 0.0
        %594 = vmatprep.subr.mxu0 0.0
        %595 = vmatpush1.msra.mxu0 0.0
        %596 = vmatprep.subr.mxu0 0.0
        %597 = vmatpush1.msra.mxu0 0.0
        %598 = vmatprep.subr.mxu0 0.0
        %599 = vmatpush1.msra.mxu0 0.0
        %600 = vmatprep.subr.mxu0 0.0
        %601 = vmatpush1.msra.mxu0 0.0
        %602 = vmatprep.subr.mxu0 0.0
        %603 = vmatpush1.msra.mxu0 0.0
        %604 = vmatprep.subr.mxu0 0.0
        %605 = vmatpush1.msra.mxu0 0.0
        %606 = vmatprep.subr.mxu0 0.0
        %607 = vmatpush1.msra.mxu0 0.0
        %608 = vmatprep.subr.mxu0 0.0
        %609 = vmatpush1.msra.mxu0 0.0
        %610 = vmatprep.subr.mxu0 0.0
        %611 = vmatpush1.msra.mxu0 0.0
        %612 = vmatprep.subr.mxu0 0.0
        %613 = vmatpush1.msra.mxu0 0.0
        %614 = vmatprep.subr.mxu0 0.0
        %615 = vmatpush1.msra.mxu0 0.0
        %616 = vmatprep.subr.mxu0 0.0
        %617 = vmatpush1.msra.mxu0 0.0
        %618 = vmatprep.subr.mxu0 0.0
        %619 = vmatpush1.msra.mxu0 0.0
        %620 = vmatprep.subr.mxu0 0.0
        %621 = vmatpush1.msra.mxu0 0.0
        %622 = vmatprep.subr.mxu0 0.0
        %623 = vmatpush1.msra.mxu0 0.0
        %624 = vmatprep.subr.mxu0 0.0
        %625 = vmatpush1.msra.mxu0 0.0
        %626 = vmatprep.subr.mxu0 0.0
        %627 = vmatpush1.msra.mxu0 0.0
        %628 = vmatprep.subr.mxu0 0.0
        %629 = vmatpush1.msra.mxu0 0.0
        %630 = vmatprep.subr.mxu0 0.0
        %631 = vmatpush1.msra.mxu0 0.0
        %632 = vmatprep.subr.mxu0 0.0
        %633 = vmatpush1.msra.mxu0 0.0
        %634 = vmatprep.subr.mxu0 0.0
        %635 = vmatpush1.msra.mxu0 0.0
        %636 = vmatprep.subr.mxu0 0.0
        %637 = vmatpush1.msra.mxu0 0.0
        %638 = vmatprep.subr.mxu0 0.0
        %639 = vmatpush1.msra.mxu0 0.0
        %640 = vmatprep.subr.mxu0 0.0
        %641 = vmatpush1.msra.mxu0 0.0
        %642 = vmatprep.subr.mxu0 0.0
        %643 = vmatpush1.msra.mxu0 0.0
        %644 = vmatprep.subr.mxu0 0.0
        %645 = vmatpush1.msra.mxu0 0.0
        %646 = vmatprep.mubr.f32.mxu0 0.0
        %v647 = vand.u32 %v189, 4294901760
        %648 = vmatmul.mubr.f32.gmra.mrb[0].mxu0 %v647
        %v649 = vpop.f32.mrb[0].mxu0
        %v650 = vadd.f32 %v554, %v649
        %v651 = vpop.f32.mrb[0].mxu0
        %v652 = vadd.f32 %v556, %v651
        %653 = vdwg.mxu0
        %v654 = vand.u32 %v176, 4294901760
        %655 = vmatprep.subr.mxu0 %v654
        %v656 = vand.u32 %v175, 4294901760
        %657 = vmatpush1.msra.mxu0 %v656
        %v658 = vand.u32 %v179, 4294901760
        %659 = vmatprep.subr.mxu0 %v658
        %v660 = vand.u32 %v178, 4294901760
        %661 = vmatpush1.msra.mxu0 %v660
        %v662 = vand.u32 %v182, 4294901760
        %663 = vmatprep.subr.mxu0 %v662
        %v664 = vand.u32 %v181, 4294901760
        %665 = vmatpush1.msra.mxu0 %v664
        %v666 = vand.u32 %v185, 4294901760
        %667 = vmatprep.subr.mxu0 %v666
        %v668 = vand.u32 %v184, 4294901760
        %669 = vmatpush1.msra.mxu0 %v668
        %670 = vmatprep.subr.mxu0 0.0
        %671 = vmatpush1.msra.mxu0 0.0
        %672 = vmatprep.subr.mxu0 0.0
        %673 = vmatpush1.msra.mxu0 0.0
        %674 = vmatprep.subr.mxu0 0.0
        %675 = vmatpush1.msra.mxu0 0.0
        %676 = vmatprep.subr.mxu0 0.0
        %677 = vmatpush1.msra.mxu0 0.0
        %678 = vmatprep.subr.mxu0 0.0
        %679 = vmatpush1.msra.mxu0 0.0
        %680 = vmatprep.subr.mxu0 0.0
        %681 = vmatpush1.msra.mxu0 0.0
        %682 = vmatprep.subr.mxu0 0.0
        %683 = vmatpush1.msra.mxu0 0.0
        %684 = vmatprep.subr.mxu0 0.0
        %685 = vmatpush1.msra.mxu0 0.0
        %686 = vmatprep.subr.mxu0 0.0
        %687 = vmatpush1.msra.mxu0 0.0
        %688 = vmatprep.subr.mxu0 0.0
        %689 = vmatpush1.msra.mxu0 0.0
        %690 = vmatprep.subr.mxu0 0.0
        %691 = vmatpush1.msra.mxu0 0.0
        %692 = vmatprep.subr.mxu0 0.0
        %693 = vmatpush1.msra.mxu0 0.0
        %694 = vmatprep.subr.mxu0 0.0
        %695 = vmatpush1.msra.mxu0 0.0
        %696 = vmatprep.subr.mxu0 0.0
        %697 = vmatpush1.msra.mxu0 0.0
        %698 = vmatprep.subr.mxu0 0.0
        %699 = vmatpush1.msra.mxu0 0.0
        %700 = vmatprep.subr.mxu0 0.0
        %701 = vmatpush1.msra.mxu0 0.0
        %702 = vmatprep.subr.mxu0 0.0
        %703 = vmatpush1.msra.mxu0 0.0
        %704 = vmatprep.subr.mxu0 0.0
        %705 = vmatpush1.msra.mxu0 0.0
        %706 = vmatprep.subr.mxu0 0.0
        %707 = vmatpush1.msra.mxu0 0.0
        %708 = vmatprep.subr.mxu0 0.0
        %709 = vmatpush1.msra.mxu0 0.0
        %710 = vmatprep.subr.mxu0 0.0
        %711 = vmatpush1.msra.mxu0 0.0
        %712 = vmatprep.subr.mxu0 0.0
        %713 = vmatpush1.msra.mxu0 0.0
        %714 = vmatprep.subr.mxu0 0.0
        %715 = vmatpush1.msra.mxu0 0.0
        %716 = vmatprep.subr.mxu0 0.0
        %717 = vmatpush1.msra.mxu0 0.0
        %718 = vmatprep.subr.mxu0 0.0
        %719 = vmatpush1.msra.mxu0 0.0
        %720 = vmatprep.subr.mxu0 0.0
        %721 = vmatpush1.msra.mxu0 0.0
        %722 = vmatprep.subr.mxu0 0.0
        %723 = vmatpush1.msra.mxu0 0.0
        %724 = vmatprep.subr.mxu0 0.0
        %725 = vmatpush1.msra.mxu0 0.0
        %726 = vmatprep.mubr.f32.mxu0 0.0
        %v727 = vand.u32 %v189, 4294901760
        %728 = vmatmul.mubr.f32.gmra.mrb[0].mxu0 %v727
        %v729 = vpop.f32.mrb[0].mxu0
        %v730 = vadd.f32 %v650, %v729
        %v731 = vpop.f32.mrb[0].mxu0
        %v732 = vadd.f32 %v652, %v731
        %733 = vdwg.mxu0
        %734 = vmatprep.subr.mxu0 0.0
        %v735 = vand.u32 %v177, 4294901760
        %736 = vmatpush1.msra.mxu0 %v735
        %737 = vmatprep.subr.mxu0 0.0
        %v738 = vand.u32 %v180, 4294901760
        %739 = vmatpush1.msra.mxu0 %v738
        %740 = vmatprep.subr.mxu0 0.0
        %v741 = vand.u32 %v183, 4294901760
        %742 = vmatpush1.msra.mxu0 %v741
        %743 = vmatprep.subr.mxu0 0.0
        %v744 = vand.u32 %v186, 4294901760
        %745 = vmatpush1.msra.mxu0 %v744
        %746 = vmatprep.subr.mxu0 0.0
        %747 = vmatpush1.msra.mxu0 0.0
        %748 = vmatprep.subr.mxu0 0.0
        %749 = vmatpush1.msra.mxu0 0.0
        %750 = vmatprep.subr.mxu0 0.0
        %751 = vmatpush1.msra.mxu0 0.0
        %752 = vmatprep.subr.mxu0 0.0
        %753 = vmatpush1.msra.mxu0 0.0
        %754 = vmatprep.subr.mxu0 0.0
        %755 = vmatpush1.msra.mxu0 0.0
        %756 = vmatprep.subr.mxu0 0.0
        %757 = vmatpush1.msra.mxu0 0.0
        %758 = vmatprep.subr.mxu0 0.0
        %759 = vmatpush1.msra.mxu0 0.0
        %760 = vmatprep.subr.mxu0 0.0
        %761 = vmatpush1.msra.mxu0 0.0
        %762 = vmatprep.subr.mxu0 0.0
        %763 = vmatpush1.msra.mxu0 0.0
        %764 = vmatprep.subr.mxu0 0.0
        %765 = vmatpush1.msra.mxu0 0.0
        %766 = vmatprep.subr.mxu0 0.0
        %767 = vmatpush1.msra.mxu0 0.0
        %768 = vmatprep.subr.mxu0 0.0
        %769 = vmatpush1.msra.mxu0 0.0
        %770 = vmatprep.subr.mxu0 0.0
        %771 = vmatpush1.msra.mxu0 0.0
        %772 = vmatprep.subr.mxu0 0.0
        %773 = vmatpush1.msra.mxu0 0.0
        %774 = vmatprep.subr.mxu0 0.0
        %775 = vmatpush1.msra.mxu0 0.0
        %776 = vmatprep.subr.mxu0 0.0
        %777 = vmatpush1.msra.mxu0 0.0
        %778 = vmatprep.subr.mxu0 0.0
        %779 = vmatpush1.msra.mxu0 0.0
        %780 = vmatprep.subr.mxu0 0.0
        %781 = vmatpush1.msra.mxu0 0.0
        %782 = vmatprep.subr.mxu0 0.0
        %783 = vmatpush1.msra.mxu0 0.0
        %784 = vmatprep.subr.mxu0 0.0
        %785 = vmatpush1.msra.mxu0 0.0
        %786 = vmatprep.subr.mxu0 0.0
        %787 = vmatpush1.msra.mxu0 0.0
        %788 = vmatprep.subr.mxu0 0.0
        %789 = vmatpush1.msra.mxu0 0.0
        %790 = vmatprep.subr.mxu0 0.0
        %791 = vmatpush1.msra.mxu0 0.0
        %792 = vmatprep.subr.mxu0 0.0
        %793 = vmatpush1.msra.mxu0 0.0
        %794 = vmatprep.subr.mxu0 0.0
        %795 = vmatpush1.msra.mxu0 0.0
        %796 = vmatprep.subr.mxu0 0.0
        %797 = vmatpush1.msra.mxu0 0.0
        %798 = vmatprep.subr.mxu0 0.0
        %799 = vmatpush1.msra.mxu0 0.0
        %800 = vmatprep.subr.mxu0 0.0
        %801 = vmatpush1.msra.mxu0 0.0
        %802 = vmatprep.mubr.f32.mxu0 0.0
        %v803 = vand.u32 %v189, 4294901760
        %v804 = vsub.f32 %v189, %v803
        %v805 = vand.u32 %v804, 4294901760
        %v806 = vsub.f32 %v804, %v805
        %v807 = vand.u32 %v806, 4294901760
        %808 = vmatmul.mubr.f32.gmra.mrb[0].mxu0 %v807
        %v809 = vpop.f32.mrb[0].mxu0
        %v810 = vadd.f32 0.0, %v809
        %v811 = vpop.f32.mrb[0].mxu0
        %812 = vdwg.mxu0
        %813 = vmatprep.subr.mxu0 0.0
        %v814 = vand.u32 %v177, 4294901760
        %v815 = vsub.f32 %v177, %v814
        %v816 = vand.u32 %v815, 4294901760
        %v817 = vsub.f32 %v815, %v816
        %v818 = vand.u32 %v817, 4294901760
        %819 = vmatpush1.msra.mxu0 %v818
        %820 = vmatprep.subr.mxu0 0.0
        %v821 = vand.u32 %v180, 4294901760
        %v822 = vsub.f32 %v180, %v821
        %v823 = vand.u32 %v822, 4294901760
        %v824 = vsub.f32 %v822, %v823
        %v825 = vand.u32 %v824, 4294901760
        %826 = vmatpush1.msra.mxu0 %v825
        %827 = vmatprep.subr.mxu0 0.0
        %v828 = vand.u32 %v183, 4294901760
        %v829 = vsub.f32 %v183, %v828
        %v830 = vand.u32 %v829, 4294901760
        %v831 = vsub.f32 %v829, %v830
        %v832 = vand.u32 %v831, 4294901760
        %833 = vmatpush1.msra.mxu0 %v832
        %834 = vmatprep.subr.mxu0 0.0
        %v835 = vand.u32 %v186, 4294901760
        %v836 = vsub.f32 %v186, %v835
        %v837 = vand.u32 %v836, 4294901760
        %v838 = vsub.f32 %v836, %v837
        %v839 = vand.u32 %v838, 4294901760
        %840 = vmatpush1.msra.mxu0 %v839
        %841 = vmatprep.subr.mxu0 0.0
        %842 = vmatpush1.msra.mxu0 0.0
        %843 = vmatprep.subr.mxu0 0.0
        %844 = vmatpush1.msra.mxu0 0.0
        %845 = vmatprep.subr.mxu0 0.0
        %846 = vmatpush1.msra.mxu0 0.0
        %847 = vmatprep.subr.mxu0 0.0
        %848 = vmatpush1.msra.mxu0 0.0
        %849 = vmatprep.subr.mxu0 0.0
        %850 = vmatpush1.msra.mxu0 0.0
        %851 = vmatprep.subr.mxu0 0.0
        %852 = vmatpush1.msra.mxu0 0.0
        %853 = vmatprep.subr.mxu0 0.0
        %854 = vmatpush1.msra.mxu0 0.0
        %855 = vmatprep.subr.mxu0 0.0
        %856 = vmatpush1.msra.mxu0 0.0
        %857 = vmatprep.subr.mxu0 0.0
        %858 = vmatpush1.msra.mxu0 0.0
        %859 = vmatprep.subr.mxu0 0.0
        %860 = vmatpush1.msra.mxu0 0.0
        %861 = vmatprep.subr.mxu0 0.0
        %862 = vmatpush1.msra.mxu0 0.0
        %863 = vmatprep.subr.mxu0 0.0
        %864 = vmatpush1.msra.mxu0 0.0
        %865 = vmatprep.subr.mxu0 0.0
        %866 = vmatpush1.msra.mxu0 0.0
        %867 = vmatprep.subr.mxu0 0.0
        %868 = vmatpush1.msra.mxu0 0.0
        %869 = vmatprep.subr.mxu0 0.0
        %870 = vmatpush1.msra.mxu0 0.0
        %871 = vmatprep.subr.mxu0 0.0
        %872 = vmatpush1.msra.mxu0 0.0
        %873 = vmatprep.subr.mxu0 0.0
        %874 = vmatpush1.msra.mxu0 0.0
        %875 = vmatprep.subr.mxu0 0.0
        %876 = vmatpush1.msra.mxu0 0.0
        %877 = vmatprep.subr.mxu0 0.0
        %878 = vmatpush1.msra.mxu0 0.0
        %879 = vmatprep.subr.mxu0 0.0
        %880 = vmatpush1.msra.mxu0 0.0
        %881 = vmatprep.subr.mxu0 0.0
        %882 = vmatpush1.msra.mxu0 0.0
        %883 = vmatprep.subr.mxu0 0.0
        %884 = vmatpush1.msra.mxu0 0.0
        %885 = vmatprep.subr.mxu0 0.0
        %886 = vmatpush1.msra.mxu0 0.0
        %887 = vmatprep.subr.mxu0 0.0
        %888 = vmatpush1.msra.mxu0 0.0
        %889 = vmatprep.subr.mxu0 0.0
        %890 = vmatpush1.msra.mxu0 0.0
        %891 = vmatprep.subr.mxu0 0.0
        %892 = vmatpush1.msra.mxu0 0.0
        %893 = vmatprep.subr.mxu0 0.0
        %894 = vmatpush1.msra.mxu0 0.0
        %895 = vmatprep.subr.mxu0 0.0
        %896 = vmatpush1.msra.mxu0 0.0
        %897 = vmatprep.mubr.f32.mxu0 0.0
        %v898 = vand.u32 %v189, 4294901760
        %899 = vmatmul.mubr.f32.gmra.mrb[0].mxu0 %v898
        %v900 = vpop.f32.mrb[0].mxu0
        %v901 = vadd.f32 %v810, %v900
        %v902 = vpop.f32.mrb[0].mxu0
        %903 = vdwg.mxu0
        %904 = vmatprep.subr.mxu0 0.0
        %v905 = vand.u32 %v177, 4294901760
        %v906 = vsub.f32 %v177, %v905
        %907 = vmatpush1.msra.mxu0 %v906
        %908 = vmatprep.subr.mxu0 0.0
        %v909 = vand.u32 %v180, 4294901760
        %v910 = vsub.f32 %v180, %v909
        %911 = vmatpush1.msra.mxu0 %v910
        %912 = vmatprep.subr.mxu0 0.0
        %v913 = vand.u32 %v183, 4294901760
        %v914 = vsub.f32 %v183, %v913
        %915 = vmatpush1.msra.mxu0 %v914
        %916 = vmatprep.subr.mxu0 0.0
        %v917 = vand.u32 %v186, 4294901760
        %v918 = vsub.f32 %v186, %v917
        %919 = vmatpush1.msra.mxu0 %v918
        %920 = vmatprep.subr.mxu0 0.0
        %921 = vmatpush1.msra.mxu0 0.0
        %922 = vmatprep.subr.mxu0 0.0
        %923 = vmatpush1.msra.mxu0 0.0
        %924 = vmatprep.subr.mxu0 0.0
        %925 = vmatpush1.msra.mxu0 0.0
        %926 = vmatprep.subr.mxu0 0.0
        %927 = vmatpush1.msra.mxu0 0.0
        %928 = vmatprep.subr.mxu0 0.0
        %929 = vmatpush1.msra.mxu0 0.0
        %930 = vmatprep.subr.mxu0 0.0
        %931 = vmatpush1.msra.mxu0 0.0
        %932 = vmatprep.subr.mxu0 0.0
        %933 = vmatpush1.msra.mxu0 0.0
        %934 = vmatprep.subr.mxu0 0.0
        %935 = vmatpush1.msra.mxu0 0.0
        %936 = vmatprep.subr.mxu0 0.0
        %937 = vmatpush1.msra.mxu0 0.0
        %938 = vmatprep.subr.mxu0 0.0
        %939 = vmatpush1.msra.mxu0 0.0
        %940 = vmatprep.subr.mxu0 0.0
        %941 = vmatpush1.msra.mxu0 0.0
        %942 = vmatprep.subr.mxu0 0.0
        %943 = vmatpush1.msra.mxu0 0.0
        %944 = vmatprep.subr.mxu0 0.0
        %945 = vmatpush1.msra.mxu0 0.0
        %946 = vmatprep.subr.mxu0 0.0
        %947 = vmatpush1.msra.mxu0 0.0
        %948 = vmatprep.subr.mxu0 0.0
        %949 = vmatpush1.msra.mxu0 0.0
        %950 = vmatprep.subr.mxu0 0.0
        %951 = vmatpush1.msra.mxu0 0.0
        %952 = vmatprep.subr.mxu0 0.0
        %953 = vmatpush1.msra.mxu0 0.0
        %954 = vmatprep.subr.mxu0 0.0
        %955 = vmatpush1.msra.mxu0 0.0
        %956 = vmatprep.subr.mxu0 0.0
        %957 = vmatpush1.msra.mxu0 0.0
        %958 = vmatprep.subr.mxu0 0.0
        %959 = vmatpush1.msra.mxu0 0.0
        %960 = vmatprep.subr.mxu0 0.0
        %961 = vmatpush1.msra.mxu0 0.0
        %962 = vmatprep.subr.mxu0 0.0
        %963 = vmatpush1.msra.mxu0 0.0
        %964 = vmatprep.subr.mxu0 0.0
        %965 = vmatpush1.msra.mxu0 0.0
        %966 = vmatprep.subr.mxu0 0.0
        %967 = vmatpush1.msra.mxu0 0.0
        %968 = vmatprep.subr.mxu0 0.0
        %969 = vmatpush1.msra.mxu0 0.0
        %970 = vmatprep.subr.mxu0 0.0
        %971 = vmatpush1.msra.mxu0 0.0
        %972 = vmatprep.subr.mxu0 0.0
        %973 = vmatpush1.msra.mxu0 0.0
        %974 = vmatprep.subr.mxu0 0.0
        %975 = vmatpush1.msra.mxu0 0.0
        %976 = vmatprep.mubr.f32.mxu0 0.0
        %v977 = vand.u32 %v189, 4294901760
        %v978 = vsub.f32 %v189, %v977
        %979 = vmatmul.mubr.f32.gmra.mrb[0].mxu0 %v978
        %v980 = vpop.f32.mrb[0].mxu0
        %v981 = vadd.f32 %v901, %v980
        %v982 = vpop.f32.mrb[0].mxu0
        %983 = vdwg.mxu0
        %984 = vmatprep.subr.mxu0 0.0
        %v985 = vand.u32 %v177, 4294901760
        %986 = vmatpush1.msra.mxu0 %v985
        %987 = vmatprep.subr.mxu0 0.0
        %v988 = vand.u32 %v180, 4294901760
        %989 = vmatpush1.msra.mxu0 %v988
        %990 = vmatprep.subr.mxu0 0.0
        %v991 = vand.u32 %v183, 4294901760
        %992 = vmatpush1.msra.mxu0 %v991
        %993 = vmatprep.subr.mxu0 0.0
        %v994 = vand.u32 %v186, 4294901760
        %995 = vmatpush1.msra.mxu0 %v994
        %996 = vmatprep.subr.mxu0 0.0
        %997 = vmatpush1.msra.mxu0 0.0
        %998 = vmatprep.subr.mxu0 0.0
        %999 = vmatpush1.msra.mxu0 0.0
        %1000 = vmatprep.subr.mxu0 0.0
        %1001 = vmatpush1.msra.mxu0 0.0
        %1002 = vmatprep.subr.mxu0 0.0
        %1003 = vmatpush1.msra.mxu0 0.0
        %1004 = vmatprep.subr.mxu0 0.0
        %1005 = vmatpush1.msra.mxu0 0.0
        %1006 = vmatprep.subr.mxu0 0.0
        %1007 = vmatpush1.msra.mxu0 0.0
        %1008 = vmatprep.subr.mxu0 0.0
        %1009 = vmatpush1.msra.mxu0 0.0
        %1010 = vmatprep.subr.mxu0 0.0
        %1011 = vmatpush1.msra.mxu0 0.0
        %1012 = vmatprep.subr.mxu0 0.0
        %1013 = vmatpush1.msra.mxu0 0.0
        %1014 = vmatprep.subr.mxu0 0.0
        %1015 = vmatpush1.msra.mxu0 0.0
        %1016 = vmatprep.subr.mxu0 0.0
        %1017 = vmatpush1.msra.mxu0 0.0
        %1018 = vmatprep.subr.mxu0 0.0
        %1019 = vmatpush1.msra.mxu0 0.0
        %1020 = vmatprep.subr.mxu0 0.0
        %1021 = vmatpush1.msra.mxu0 0.0
        %1022 = vmatprep.subr.mxu0 0.0
        %1023 = vmatpush1.msra.mxu0 0.0
        %1024 = vmatprep.subr.mxu0 0.0
        %1025 = vmatpush1.msra.mxu0 0.0
        %1026 = vmatprep.subr.mxu0 0.0
        %1027 = vmatpush1.msra.mxu0 0.0
        %1028 = vmatprep.subr.mxu0 0.0
        %1029 = vmatpush1.msra.mxu0 0.0
        %1030 = vmatprep.subr.mxu0 0.0
        %1031 = vmatpush1.msra.mxu0 0.0
        %1032 = vmatprep.subr.mxu0 0.0
        %1033 = vmatpush1.msra.mxu0 0.0
        %1034 = vmatprep.subr.mxu0 0.0
        %1035 = vmatpush1.msra.mxu0 0.0
        %1036 = vmatprep.subr.mxu0 0.0
        %1037 = vmatpush1.msra.mxu0 0.0
        %1038 = vmatprep.subr.mxu0 0.0
        %1039 = vmatpush1.msra.mxu0 0.0
        %1040 = vmatprep.subr.mxu0 0.0
        %1041 = vmatpush1.msra.mxu0 0.0
        %1042 = vmatprep.subr.mxu0 0.0
        %1043 = vmatpush1.msra.mxu0 0.0
        %1044 = vmatprep.subr.mxu0 0.0
        %1045 = vmatpush1.msra.mxu0 0.0
        %1046 = vmatprep.subr.mxu0 0.0
        %1047 = vmatpush1.msra.mxu0 0.0
        %1048 = vmatprep.subr.mxu0 0.0
        %1049 = vmatpush1.msra.mxu0 0.0
        %1050 = vmatprep.subr.mxu0 0.0
        %1051 = vmatpush1.msra.mxu0 0.0
        %1052 = vmatprep.mubr.f32.mxu0 0.0
        %v1053 = vand.u32 %v189, 4294901760
        %v1054 = vsub.f32 %v189, %v1053
        %v1055 = vand.u32 %v1054, 4294901760
        %1056 = vmatmul.mubr.f32.gmra.mrb[0].mxu0 %v1055
        %v1057 = vpop.f32.mrb[0].mxu0
        %v1058 = vadd.f32 %v981, %v1057
        %v1059 = vpop.f32.mrb[0].mxu0
        %1060 = vdwg.mxu0
        %1061 = vmatprep.subr.mxu0 0.0
        %v1062 = vand.u32 %v177, 4294901760
        %v1063 = vsub.f32 %v177, %v1062
        %v1064 = vand.u32 %v1063, 4294901760
        %1065 = vmatpush1.msra.mxu0 %v1064
        %1066 = vmatprep.subr.mxu0 0.0
        %v1067 = vand.u32 %v180, 4294901760
        %v1068 = vsub.f32 %v180, %v1067
        %v1069 = vand.u32 %v1068, 4294901760
        %1070 = vmatpush1.msra.mxu0 %v1069
        %1071 = vmatprep.subr.mxu0 0.0
        %v1072 = vand.u32 %v183, 4294901760
        %v1073 = vsub.f32 %v183, %v1072
        %v1074 = vand.u32 %v1073, 4294901760
        %1075 = vmatpush1.msra.mxu0 %v1074
        %1076 = vmatprep.subr.mxu0 0.0
        %v1077 = vand.u32 %v186, 4294901760
        %v1078 = vsub.f32 %v186, %v1077
        %v1079 = vand.u32 %v1078, 4294901760
        %1080 = vmatpush1.msra.mxu0 %v1079
        %1081 = vmatprep.subr.mxu0 0.0
        %1082 = vmatpush1.msra.mxu0 0.0
        %1083 = vmatprep.subr.mxu0 0.0
        %1084 = vmatpush1.msra.mxu0 0.0
        %1085 = vmatprep.subr.mxu0 0.0
        %1086 = vmatpush1.msra.mxu0 0.0
        %1087 = vmatprep.subr.mxu0 0.0
        %1088 = vmatpush1.msra.mxu0 0.0
        %1089 = vmatprep.subr.mxu0 0.0
        %1090 = vmatpush1.msra.mxu0 0.0
        %1091 = vmatprep.subr.mxu0 0.0
        %1092 = vmatpush1.msra.mxu0 0.0
        %1093 = vmatprep.subr.mxu0 0.0
        %1094 = vmatpush1.msra.mxu0 0.0
        %1095 = vmatprep.subr.mxu0 0.0
        %1096 = vmatpush1.msra.mxu0 0.0
        %1097 = vmatprep.subr.mxu0 0.0
        %1098 = vmatpush1.msra.mxu0 0.0
        %1099 = vmatprep.subr.mxu0 0.0
        %1100 = vmatpush1.msra.mxu0 0.0
        %1101 = vmatprep.subr.mxu0 0.0
        %1102 = vmatpush1.msra.mxu0 0.0
        %1103 = vmatprep.subr.mxu0 0.0
        %1104 = vmatpush1.msra.mxu0 0.0
        %1105 = vmatprep.subr.mxu0 0.0
        %1106 = vmatpush1.msra.mxu0 0.0
        %1107 = vmatprep.subr.mxu0 0.0
        %1108 = vmatpush1.msra.mxu0 0.0
        %1109 = vmatprep.subr.mxu0 0.0
        %1110 = vmatpush1.msra.mxu0 0.0
        %1111 = vmatprep.subr.mxu0 0.0
        %1112 = vmatpush1.msra.mxu0 0.0
        %1113 = vmatprep.subr.mxu0 0.0
        %1114 = vmatpush1.msra.mxu0 0.0
        %1115 = vmatprep.subr.mxu0 0.0
        %1116 = vmatpush1.msra.mxu0 0.0
        %1117 = vmatprep.subr.mxu0 0.0
        %1118 = vmatpush1.msra.mxu0 0.0
        %1119 = vmatprep.subr.mxu0 0.0
        %1120 = vmatpush1.msra.mxu0 0.0
        %1121 = vmatprep.subr.mxu0 0.0
        %1122 = vmatpush1.msra.mxu0 0.0
        %1123 = vmatprep.subr.mxu0 0.0
        %1124 = vmatpush1.msra.mxu0 0.0
        %1125 = vmatprep.subr.mxu0 0.0
        %1126 = vmatpush1.msra.mxu0 0.0
        %1127 = vmatprep.subr.mxu0 0.0
        %1128 = vmatpush1.msra.mxu0 0.0
        %1129 = vmatprep.subr.mxu0 0.0
        %1130 = vmatpush1.msra.mxu0 0.0
        %1131 = vmatprep.subr.mxu0 0.0
        %1132 = vmatpush1.msra.mxu0 0.0
        %1133 = vmatprep.subr.mxu0 0.0
        %1134 = vmatpush1.msra.mxu0 0.0
        %1135 = vmatprep.subr.mxu0 0.0
        %1136 = vmatpush1.msra.mxu0 0.0
        %1137 = vmatprep.mubr.f32.mxu0 0.0
        %v1138 = vand.u32 %v189, 4294901760
        %1139 = vmatmul.mubr.f32.gmra.mrb[0].mxu0 %v1138
        %v1140 = vpop.f32.mrb[0].mxu0
        %v1141 = vadd.f32 %v1058, %v1140
        %v1142 = vpop.f32.mrb[0].mxu0
        %1143 = vdwg.mxu0
        %1144 = vmatprep.subr.mxu0 0.0
        %v1145 = vand.u32 %v177, 4294901760
        %1146 = vmatpush1.msra.mxu0 %v1145
        %1147 = vmatprep.subr.mxu0 0.0
        %v1148 = vand.u32 %v180, 4294901760
        %1149 = vmatpush1.msra.mxu0 %v1148
        %1150 = vmatprep.subr.mxu0 0.0
        %v1151 = vand.u32 %v183, 4294901760
        %1152 = vmatpush1.msra.mxu0 %v1151
        %1153 = vmatprep.subr.mxu0 0.0
        %v1154 = vand.u32 %v186, 4294901760
        %1155 = vmatpush1.msra.mxu0 %v1154
        %1156 = vmatprep.subr.mxu0 0.0
        %1157 = vmatpush1.msra.mxu0 0.0
        %1158 = vmatprep.subr.mxu0 0.0
        %1159 = vmatpush1.msra.mxu0 0.0
        %1160 = vmatprep.subr.mxu0 0.0
        %1161 = vmatpush1.msra.mxu0 0.0
        %1162 = vmatprep.subr.mxu0 0.0
        %1163 = vmatpush1.msra.mxu0 0.0
        %1164 = vmatprep.subr.mxu0 0.0
        %1165 = vmatpush1.msra.mxu0 0.0
        %1166 = vmatprep.subr.mxu0 0.0
        %1167 = vmatpush1.msra.mxu0 0.0
        %1168 = vmatprep.subr.mxu0 0.0
        %1169 = vmatpush1.msra.mxu0 0.0
        %1170 = vmatprep.subr.mxu0 0.0
        %1171 = vmatpush1.msra.mxu0 0.0
        %1172 = vmatprep.subr.mxu0 0.0
        %1173 = vmatpush1.msra.mxu0 0.0
        %1174 = vmatprep.subr.mxu0 0.0
        %1175 = vmatpush1.msra.mxu0 0.0
        %1176 = vmatprep.subr.mxu0 0.0
        %1177 = vmatpush1.msra.mxu0 0.0
        %1178 = vmatprep.subr.mxu0 0.0
        %1179 = vmatpush1.msra.mxu0 0.0
        %1180 = vmatprep.subr.mxu0 0.0
        %1181 = vmatpush1.msra.mxu0 0.0
        %1182 = vmatprep.subr.mxu0 0.0
        %1183 = vmatpush1.msra.mxu0 0.0
        %1184 = vmatprep.subr.mxu0 0.0
        %1185 = vmatpush1.msra.mxu0 0.0
        %1186 = vmatprep.subr.mxu0 0.0
        %1187 = vmatpush1.msra.mxu0 0.0
        %1188 = vmatprep.subr.mxu0 0.0
        %1189 = vmatpush1.msra.mxu0 0.0
        %1190 = vmatprep.subr.mxu0 0.0
        %1191 = vmatpush1.msra.mxu0 0.0
        %1192 = vmatprep.subr.mxu0 0.0
        %1193 = vmatpush1.msra.mxu0 0.0
        %1194 = vmatprep.subr.mxu0 0.0
        %1195 = vmatpush1.msra.mxu0 0.0
        %1196 = vmatprep.subr.mxu0 0.0
        %1197 = vmatpush1.msra.mxu0 0.0
        %1198 = vmatprep.subr.mxu0 0.0
        %1199 = vmatpush1.msra.mxu0 0.0
        %1200 = vmatprep.subr.mxu0 0.0
        %1201 = vmatpush1.msra.mxu0 0.0
        %1202 = vmatprep.subr.mxu0 0.0
        %1203 = vmatpush1.msra.mxu0 0.0
        %1204 = vmatprep.subr.mxu0 0.0
        %1205 = vmatpush1.msra.mxu0 0.0
        %1206 = vmatprep.subr.mxu0 0.0
        %1207 = vmatpush1.msra.mxu0 0.0
        %1208 = vmatprep.subr.mxu0 0.0
        %1209 = vmatpush1.msra.mxu0 0.0
        %1210 = vmatprep.subr.mxu0 0.0
        %1211 = vmatpush1.msra.mxu0 0.0
        %1212 = vmatprep.mubr.f32.mxu0 0.0
        %v1213 = vand.u32 %v189, 4294901760
        %1214 = vmatmul.mubr.f32.gmra.mrb[0].mxu0 %v1213
        %v1215 = vpop.f32.mrb[0].mxu0
        %v1216 = vadd.f32 %v1141, %v1215
        %v1217 = vpop.f32.mrb[0].mxu0
        %1218 = vdwg.mxu0
        %1219 = vmatprep.subr.mxu0 0.0
        %v1220 = vand.u32 %v730, 4294901760
        %1221 = vmatpush1.xpose.msra.mxu0 %v1220
        %1222 = vmatprep.subr.mxu0 0.0
        %1223 = vmatpush1.xpose.msra.mxu0 0.0
        %1224 = vmatprep.subr.mxu0 0.0
        %1225 = vmatpush1.xpose.msra.mxu0 0.0
        %1226 = vmatprep.subr.mxu0 0.0
        %1227 = vmatpush1.xpose.msra.mxu0 0.0
        %1228 = vmatprep.subr.mxu0 0.0
        %1229 = vmatpush1.xpose.msra.mxu0 0.0
        %1230 = vmatprep.subr.mxu0 0.0
        %1231 = vmatpush1.xpose.msra.mxu0 0.0
        %1232 = vmatprep.subr.mxu0 0.0
        %1233 = vmatpush1.xpose.msra.mxu0 0.0
        %1234 = vmatprep.subr.mxu0 0.0
        %1235 = vmatpush1.xpose.msra.mxu0 0.0
        %1236 = vmatprep.subr.mxu0 0.0
        %1237 = vmatpush1.xpose.msra.mxu0 0.0
        %1238 = vmatprep.subr.mxu0 0.0
        %1239 = vmatpush1.xpose.msra.mxu0 0.0
        %1240 = vmatprep.subr.mxu0 0.0
        %1241 = vmatpush1.xpose.msra.mxu0 0.0
        %1242 = vmatprep.subr.mxu0 0.0
        %1243 = vmatpush1.xpose.msra.mxu0 0.0
        %1244 = vmatprep.subr.mxu0 0.0
        %1245 = vmatpush1.xpose.msra.mxu0 0.0
        %1246 = vmatprep.subr.mxu0 0.0
        %1247 = vmatpush1.xpose.msra.mxu0 0.0
        %1248 = vmatprep.subr.mxu0 0.0
        %1249 = vmatpush1.xpose.msra.mxu0 0.0
        %1250 = vmatprep.subr.mxu0 0.0
        %1251 = vmatpush1.xpose.msra.mxu0 0.0
        %1252 = vmatprep.subr.mxu0 0.0
        %1253 = vmatpush1.xpose.msra.mxu0 0.0
        %1254 = vmatprep.subr.mxu0 0.0
        %1255 = vmatpush1.xpose.msra.mxu0 0.0
        %1256 = vmatprep.subr.mxu0 0.0
        %1257 = vmatpush1.xpose.msra.mxu0 0.0
        %1258 = vmatprep.subr.mxu0 0.0
        %1259 = vmatpush1.xpose.msra.mxu0 0.0
        %1260 = vmatprep.subr.mxu0 0.0
        %1261 = vmatpush1.xpose.msra.mxu0 0.0
        %1262 = vmatprep.subr.mxu0 0.0
        %1263 = vmatpush1.xpose.msra.mxu0 0.0
        %1264 = vmatprep.subr.mxu0 0.0
        %1265 = vmatpush1.xpose.msra.mxu0 0.0
        %1266 = vmatprep.subr.mxu0 0.0
        %1267 = vmatpush1.xpose.msra.mxu0 0.0
        %1268 = vmatprep.subr.mxu0 0.0
        %1269 = vmatpush1.xpose.msra.mxu0 0.0
        %1270 = vmatprep.subr.mxu0 0.0
        %1271 = vmatpush1.xpose.msra.mxu0 0.0
        %1272 = vmatprep.subr.mxu0 0.0
        %1273 = vmatpush1.xpose.msra.mxu0 0.0
        %1274 = vmatprep.subr.mxu0 0.0
        %1275 = vmatpush1.xpose.msra.mxu0 0.0
        %1276 = vmatprep.subr.mxu0 0.0
        %1277 = vmatpush1.xpose.msra.mxu0 0.0
        %1278 = vmatprep.subr.mxu0 0.0
        %1279 = vmatpush1.xpose.msra.mxu0 0.0
        %1280 = vmatprep.subr.mxu0 0.0
        %1281 = vmatpush1.xpose.msra.mxu0 0.0
        %1282 = vmatprep.subr.mxu0 0.0
        %1283 = vmatpush1.xpose.msra.mxu0 0.0
        %1284 = vmatprep.mubr.f32.mxu0 0.0
        %v1285 = vand.u32 %v732, 4294901760
        %v1286 = vsub.f32 %v732, %v1285
        %v1287 = vand.u32 %v1286, 4294901760
        %v1288 = vsub.f32 %v1286, %v1287
        %v1289 = vand.u32 %v1288, 4294901760
        %1290 = vmatmul.mubr.f32.gmra.mrb[0].mxu0 %v1289
        %v1291 = vpop.f32.mrb[0].mxu0
        %v1292 = vadd.f32 0.0, %v1291
        %v1293 = vpop.f32.mrb[0].mxu0
        %1294 = vdwg.mxu0
        %1295 = vmatprep.subr.mxu0 0.0
        %v1296 = vand.u32 %v730, 4294901760
        %v1297 = vsub.f32 %v730, %v1296
        %v1298 = vand.u32 %v1297, 4294901760
        %v1299 = vsub.f32 %v1297, %v1298
        %v1300 = vand.u32 %v1299, 4294901760
        %1301 = vmatpush1.xpose.msra.mxu0 %v1300
        %1302 = vmatprep.subr.mxu0 0.0
        %1303 = vmatpush1.xpose.msra.mxu0 0.0
        %1304 = vmatprep.subr.mxu0 0.0
        %1305 = vmatpush1.xpose.msra.mxu0 0.0
        %1306 = vmatprep.subr.mxu0 0.0
        %1307 = vmatpush1.xpose.msra.mxu0 0.0
        %1308 = vmatprep.subr.mxu0 0.0
        %1309 = vmatpush1.xpose.msra.mxu0 0.0
        %1310 = vmatprep.subr.mxu0 0.0
        %1311 = vmatpush1.xpose.msra.mxu0 0.0
        %1312 = vmatprep.subr.mxu0 0.0
        %1313 = vmatpush1.xpose.msra.mxu0 0.0
        %1314 = vmatprep.subr.mxu0 0.0
        %1315 = vmatpush1.xpose.msra.mxu0 0.0
        %1316 = vmatprep.subr.mxu0 0.0
        %1317 = vmatpush1.xpose.msra.mxu0 0.0
        %1318 = vmatprep.subr.mxu0 0.0
        %1319 = vmatpush1.xpose.msra.mxu0 0.0
        %1320 = vmatprep.subr.mxu0 0.0
        %1321 = vmatpush1.xpose.msra.mxu0 0.0
        %1322 = vmatprep.subr.mxu0 0.0
        %1323 = vmatpush1.xpose.msra.mxu0 0.0
        %1324 = vmatprep.subr.mxu0 0.0
        %1325 = vmatpush1.xpose.msra.mxu0 0.0
        %1326 = vmatprep.subr.mxu0 0.0
        %1327 = vmatpush1.xpose.msra.mxu0 0.0
        %1328 = vmatprep.subr.mxu0 0.0
        %1329 = vmatpush1.xpose.msra.mxu0 0.0
        %1330 = vmatprep.subr.mxu0 0.0
        %1331 = vmatpush1.xpose.msra.mxu0 0.0
        %1332 = vmatprep.subr.mxu0 0.0
        %1333 = vmatpush1.xpose.msra.mxu0 0.0
        %1334 = vmatprep.subr.mxu0 0.0
        %1335 = vmatpush1.xpose.msra.mxu0 0.0
        %1336 = vmatprep.subr.mxu0 0.0
        %1337 = vmatpush1.xpose.msra.mxu0 0.0
        %1338 = vmatprep.subr.mxu0 0.0
        %1339 = vmatpush1.xpose.msra.mxu0 0.0
        %1340 = vmatprep.subr.mxu0 0.0
        %1341 = vmatpush1.xpose.msra.mxu0 0.0
        %1342 = vmatprep.subr.mxu0 0.0
        %1343 = vmatpush1.xpose.msra.mxu0 0.0
        %1344 = vmatprep.subr.mxu0 0.0
        %1345 = vmatpush1.xpose.msra.mxu0 0.0
        %1346 = vmatprep.subr.mxu0 0.0
        %1347 = vmatpush1.xpose.msra.mxu0 0.0
        %1348 = vmatprep.subr.mxu0 0.0
        %1349 = vmatpush1.xpose.msra.mxu0 0.0
        %1350 = vmatprep.subr.mxu0 0.0
        %1351 = vmatpush1.xpose.msra.mxu0 0.0
        %1352 = vmatprep.subr.mxu0 0.0
        %1353 = vmatpush1.xpose.msra.mxu0 0.0
        %1354 = vmatprep.subr.mxu0 0.0
        %1355 = vmatpush1.xpose.msra.mxu0 0.0
        %1356 = vmatprep.subr.mxu0 0.0
        %1357 = vmatpush1.xpose.msra.mxu0 0.0
        %1358 = vmatprep.subr.mxu0 0.0
        %1359 = vmatpush1.xpose.msra.mxu0 0.0
        %1360 = vmatprep.subr.mxu0 0.0
        %1361 = vmatpush1.xpose.msra.mxu0 0.0
        %1362 = vmatprep.subr.mxu0 0.0
        %1363 = vmatpush1.xpose.msra.mxu0 0.0
        %1364 = vmatprep.mubr.f32.mxu0 0.0
        %v1365 = vand.u32 %v732, 4294901760
        %1366 = vmatmul.mubr.f32.gmra.mrb[0].mxu0 %v1365
        %v1367 = vpop.f32.mrb[0].mxu0
        %v1368 = vadd.f32 %v1292, %v1367
        %v1369 = vpop.f32.mrb[0].mxu0
        %1370 = vdwg.mxu0
        %1371 = vmatprep.subr.mxu0 0.0
        %v1372 = vand.u32 %v730, 4294901760
        %v1373 = vsub.f32 %v730, %v1372
        %1374 = vmatpush1.xpose.msra.mxu0 %v1373
        %1375 = vmatprep.subr.mxu0 0.0
        %1376 = vmatpush1.xpose.msra.mxu0 0.0
        %1377 = vmatprep.subr.mxu0 0.0
        %1378 = vmatpush1.xpose.msra.mxu0 0.0
        %1379 = vmatprep.subr.mxu0 0.0
        %1380 = vmatpush1.xpose.msra.mxu0 0.0
        %1381 = vmatprep.subr.mxu0 0.0
        %1382 = vmatpush1.xpose.msra.mxu0 0.0
        %1383 = vmatprep.subr.mxu0 0.0
        %1384 = vmatpush1.xpose.msra.mxu0 0.0
        %1385 = vmatprep.subr.mxu0 0.0
        %1386 = vmatpush1.xpose.msra.mxu0 0.0
        %1387 = vmatprep.subr.mxu0 0.0
        %1388 = vmatpush1.xpose.msra.mxu0 0.0
        %1389 = vmatprep.subr.mxu0 0.0
        %1390 = vmatpush1.xpose.msra.mxu0 0.0
        %1391 = vmatprep.subr.mxu0 0.0
        %1392 = vmatpush1.xpose.msra.mxu0 0.0
        %1393 = vmatprep.subr.mxu0 0.0
        %1394 = vmatpush1.xpose.msra.mxu0 0.0
        %1395 = vmatprep.subr.mxu0 0.0
        %1396 = vmatpush1.xpose.msra.mxu0 0.0
        %1397 = vmatprep.subr.mxu0 0.0
        %1398 = vmatpush1.xpose.msra.mxu0 0.0
        %1399 = vmatprep.subr.mxu0 0.0
        %1400 = vmatpush1.xpose.msra.mxu0 0.0
        %1401 = vmatprep.subr.mxu0 0.0
        %1402 = vmatpush1.xpose.msra.mxu0 0.0
        %1403 = vmatprep.subr.mxu0 0.0
        %1404 = vmatpush1.xpose.msra.mxu0 0.0
        %1405 = vmatprep.subr.mxu0 0.0
        %1406 = vmatpush1.xpose.msra.mxu0 0.0
        %1407 = vmatprep.subr.mxu0 0.0
        %1408 = vmatpush1.xpose.msra.mxu0 0.0
        %1409 = vmatprep.subr.mxu0 0.0
        %1410 = vmatpush1.xpose.msra.mxu0 0.0
        %1411 = vmatprep.subr.mxu0 0.0
        %1412 = vmatpush1.xpose.msra.mxu0 0.0
        %1413 = vmatprep.subr.mxu0 0.0
        %1414 = vmatpush1.xpose.msra.mxu0 0.0
        %1415 = vmatprep.subr.mxu0 0.0
        %1416 = vmatpush1.xpose.msra.mxu0 0.0
        %1417 = vmatprep.subr.mxu0 0.0
        %1418 = vmatpush1.xpose.msra.mxu0 0.0
        %1419 = vmatprep.subr.mxu0 0.0
        %1420 = vmatpush1.xpose.msra.mxu0 0.0
        %1421 = vmatprep.subr.mxu0 0.0
        %1422 = vmatpush1.xpose.msra.mxu0 0.0
        %1423 = vmatprep.subr.mxu0 0.0
        %1424 = vmatpush1.xpose.msra.mxu0 0.0
        %1425 = vmatprep.subr.mxu0 0.0
        %1426 = vmatpush1.xpose.msra.mxu0 0.0
        %1427 = vmatprep.subr.mxu0 0.0
        %1428 = vmatpush1.xpose.msra.mxu0 0.0
        %1429 = vmatprep.subr.mxu0 0.0
        %1430 = vmatpush1.xpose.msra.mxu0 0.0
        %1431 = vmatprep.subr.mxu0 0.0
        %1432 = vmatpush1.xpose.msra.mxu0 0.0
        %1433 = vmatprep.subr.mxu0 0.0
        %1434 = vmatpush1.xpose.msra.mxu0 0.0
        %1435 = vmatprep.subr.mxu0 0.0
        %1436 = vmatpush1.xpose.msra.mxu0 0.0
        %1437 = vmatprep.mubr.f32.mxu0 0.0
        %v1438 = vand.u32 %v732, 4294901760
        %v1439 = vsub.f32 %v732, %v1438
        %1440 = vmatmul.mubr.f32.gmra.mrb[0].mxu0 %v1439
        %v1441 = vpop.f32.mrb[0].mxu0
        %v1442 = vadd.f32 %v1368, %v1441
        %v1443 = vpop.f32.mrb[0].mxu0
        %1444 = vdwg.mxu0
        %1445 = vmatprep.subr.mxu0 0.0
        %v1446 = vand.u32 %v730, 4294901760
        %1447 = vmatpush1.xpose.msra.mxu0 %v1446
        %1448 = vmatprep.subr.mxu0 0.0
        %1449 = vmatpush1.xpose.msra.mxu0 0.0
        %1450 = vmatprep.subr.mxu0 0.0
        %1451 = vmatpush1.xpose.msra.mxu0 0.0
        %1452 = vmatprep.subr.mxu0 0.0
        %1453 = vmatpush1.xpose.msra.mxu0 0.0
        %1454 = vmatprep.subr.mxu0 0.0
        %1455 = vmatpush1.xpose.msra.mxu0 0.0
        %1456 = vmatprep.subr.mxu0 0.0
        %1457 = vmatpush1.xpose.msra.mxu0 0.0
        %1458 = vmatprep.subr.mxu0 0.0
        %1459 = vmatpush1.xpose.msra.mxu0 0.0
        %1460 = vmatprep.subr.mxu0 0.0
        %1461 = vmatpush1.xpose.msra.mxu0 0.0
        %1462 = vmatprep.subr.mxu0 0.0
        %1463 = vmatpush1.xpose.msra.mxu0 0.0
        %1464 = vmatprep.subr.mxu0 0.0
        %1465 = vmatpush1.xpose.msra.mxu0 0.0
        %1466 = vmatprep.subr.mxu0 0.0
        %1467 = vmatpush1.xpose.msra.mxu0 0.0
        %1468 = vmatprep.subr.mxu0 0.0
        %1469 = vmatpush1.xpose.msra.mxu0 0.0
        %1470 = vmatprep.subr.mxu0 0.0
        %1471 = vmatpush1.xpose.msra.mxu0 0.0
        %1472 = vmatprep.subr.mxu0 0.0
        %1473 = vmatpush1.xpose.msra.mxu0 0.0
        %1474 = vmatprep.subr.mxu0 0.0
        %1475 = vmatpush1.xpose.msra.mxu0 0.0
        %1476 = vmatprep.subr.mxu0 0.0
        %1477 = vmatpush1.xpose.msra.mxu0 0.0
        %1478 = vmatprep.subr.mxu0 0.0
        %1479 = vmatpush1.xpose.msra.mxu0 0.0
        %1480 = vmatprep.subr.mxu0 0.0
        %1481 = vmatpush1.xpose.msra.mxu0 0.0
        %1482 = vmatprep.subr.mxu0 0.0
        %1483 = vmatpush1.xpose.msra.mxu0 0.0
        %1484 = vmatprep.subr.mxu0 0.0
        %1485 = vmatpush1.xpose.msra.mxu0 0.0
        %1486 = vmatprep.subr.mxu0 0.0
        %1487 = vmatpush1.xpose.msra.mxu0 0.0
        %1488 = vmatprep.subr.mxu0 0.0
        %1489 = vmatpush1.xpose.msra.mxu0 0.0
        %1490 = vmatprep.subr.mxu0 0.0
        %1491 = vmatpush1.xpose.msra.mxu0 0.0
        %1492 = vmatprep.subr.mxu0 0.0
        %1493 = vmatpush1.xpose.msra.mxu0 0.0
        %1494 = vmatprep.subr.mxu0 0.0
        %1495 = vmatpush1.xpose.msra.mxu0 0.0
        %1496 = vmatprep.subr.mxu0 0.0
        %1497 = vmatpush1.xpose.msra.mxu0 0.0
        %1498 = vmatprep.subr.mxu0 0.0
        %1499 = vmatpush1.xpose.msra.mxu0 0.0
        %1500 = vmatprep.subr.mxu0 0.0
        %1501 = vmatpush1.xpose.msra.mxu0 0.0
        %1502 = vmatprep.subr.mxu0 0.0
        %1503 = vmatpush1.xpose.msra.mxu0 0.0
        %1504 = vmatprep.subr.mxu0 0.0
        %1505 = vmatpush1.xpose.msra.mxu0 0.0
        %1506 = vmatprep.subr.mxu0 0.0
        %1507 = vmatpush1.xpose.msra.mxu0 0.0
        %1508 = vmatprep.subr.mxu0 0.0
        %1509 = vmatpush1.xpose.msra.mxu0 0.0
        %1510 = vmatprep.mubr.f32.mxu0 0.0
        %v1511 = vand.u32 %v732, 4294901760
        %v1512 = vsub.f32 %v732, %v1511
        %v1513 = vand.u32 %v1512, 4294901760
        %1514 = vmatmul.mubr.f32.gmra.mrb[0].mxu0 %v1513
        %v1515 = vpop.f32.mrb[0].mxu0
        %v1516 = vadd.f32 %v1442, %v1515
        %v1517 = vpop.f32.mrb[0].mxu0
        %1518 = vdwg.mxu0
        %1519 = vmatprep.subr.mxu0 0.0
        %v1520 = vand.u32 %v730, 4294901760
        %v1521 = vsub.f32 %v730, %v1520
        %v1522 = vand.u32 %v1521, 4294901760
        %1523 = vmatpush1.xpose.msra.mxu0 %v1522
        %1524 = vmatprep.subr.mxu0 0.0
        %1525 = vmatpush1.xpose.msra.mxu0 0.0
        %1526 = vmatprep.subr.mxu0 0.0
        %1527 = vmatpush1.xpose.msra.mxu0 0.0
        %1528 = vmatprep.subr.mxu0 0.0
        %1529 = vmatpush1.xpose.msra.mxu0 0.0
        %1530 = vmatprep.subr.mxu0 0.0
        %1531 = vmatpush1.xpose.msra.mxu0 0.0
        %1532 = vmatprep.subr.mxu0 0.0
        %1533 = vmatpush1.xpose.msra.mxu0 0.0
        %1534 = vmatprep.subr.mxu0 0.0
        %1535 = vmatpush1.xpose.msra.mxu0 0.0
        %1536 = vmatprep.subr.mxu0 0.0
        %1537 = vmatpush1.xpose.msra.mxu0 0.0
        %1538 = vmatprep.subr.mxu0 0.0
        %1539 = vmatpush1.xpose.msra.mxu0 0.0
        %1540 = vmatprep.subr.mxu0 0.0
        %1541 = vmatpush1.xpose.msra.mxu0 0.0
        %1542 = vmatprep.subr.mxu0 0.0
        %1543 = vmatpush1.xpose.msra.mxu0 0.0
        %1544 = vmatprep.subr.mxu0 0.0
        %1545 = vmatpush1.xpose.msra.mxu0 0.0
        %1546 = vmatprep.subr.mxu0 0.0
        %1547 = vmatpush1.xpose.msra.mxu0 0.0
        %1548 = vmatprep.subr.mxu0 0.0
        %1549 = vmatpush1.xpose.msra.mxu0 0.0
        %1550 = vmatprep.subr.mxu0 0.0
        %1551 = vmatpush1.xpose.msra.mxu0 0.0
        %1552 = vmatprep.subr.mxu0 0.0
        %1553 = vmatpush1.xpose.msra.mxu0 0.0
        %1554 = vmatprep.subr.mxu0 0.0
        %1555 = vmatpush1.xpose.msra.mxu0 0.0
        %1556 = vmatprep.subr.mxu0 0.0
        %1557 = vmatpush1.xpose.msra.mxu0 0.0
        %1558 = vmatprep.subr.mxu0 0.0
        %1559 = vmatpush1.xpose.msra.mxu0 0.0
        %1560 = vmatprep.subr.mxu0 0.0
        %1561 = vmatpush1.xpose.msra.mxu0 0.0
        %1562 = vmatprep.subr.mxu0 0.0
        %1563 = vmatpush1.xpose.msra.mxu0 0.0
        %1564 = vmatprep.subr.mxu0 0.0
        %1565 = vmatpush1.xpose.msra.mxu0 0.0
        %1566 = vmatprep.subr.mxu0 0.0
        %1567 = vmatpush1.xpose.msra.mxu0 0.0
        %1568 = vmatprep.subr.mxu0 0.0
        %1569 = vmatpush1.xpose.msra.mxu0 0.0
        %1570 = vmatprep.subr.mxu0 0.0
        %1571 = vmatpush1.xpose.msra.mxu0 0.0
        %1572 = vmatprep.subr.mxu0 0.0
        %1573 = vmatpush1.xpose.msra.mxu0 0.0
        %1574 = vmatprep.subr.mxu0 0.0
        %1575 = vmatpush1.xpose.msra.mxu0 0.0
        %1576 = vmatprep.subr.mxu0 0.0
        %1577 = vmatpush1.xpose.msra.mxu0 0.0
        %1578 = vmatprep.subr.mxu0 0.0
        %1579 = vmatpush1.xpose.msra.mxu0 0.0
        %1580 = vmatprep.subr.mxu0 0.0
        %1581 = vmatpush1.xpose.msra.mxu0 0.0
        %1582 = vmatprep.subr.mxu0 0.0
        %1583 = vmatpush1.xpose.msra.mxu0 0.0
        %1584 = vmatprep.subr.mxu0 0.0
        %1585 = vmatpush1.xpose.msra.mxu0 0.0
        %1586 = vmatprep.mubr.f32.mxu0 0.0
        %v1587 = vand.u32 %v732, 4294901760
        %1588 = vmatmul.mubr.f32.gmra.mrb[0].mxu0 %v1587
        %v1589 = vpop.f32.mrb[0].mxu0
        %v1590 = vadd.f32 %v1516, %v1589
        %v1591 = vpop.f32.mrb[0].mxu0
        %1592 = vdwg.mxu0
        %1593 = vmatprep.subr.mxu0 0.0
        %v1594 = vand.u32 %v730, 4294901760
        %1595 = vmatpush1.xpose.msra.mxu0 %v1594
        %1596 = vmatprep.subr.mxu0 0.0
        %1597 = vmatpush1.xpose.msra.mxu0 0.0
        %1598 = vmatprep.subr.mxu0 0.0
        %1599 = vmatpush1.xpose.msra.mxu0 0.0
        %1600 = vmatprep.subr.mxu0 0.0
        %1601 = vmatpush1.xpose.msra.mxu0 0.0
        %1602 = vmatprep.subr.mxu0 0.0
        %1603 = vmatpush1.xpose.msra.mxu0 0.0
        %1604 = vmatprep.subr.mxu0 0.0
        %1605 = vmatpush1.xpose.msra.mxu0 0.0
        %1606 = vmatprep.subr.mxu0 0.0
        %1607 = vmatpush1.xpose.msra.mxu0 0.0
        %1608 = vmatprep.subr.mxu0 0.0
        %1609 = vmatpush1.xpose.msra.mxu0 0.0
        %1610 = vmatprep.subr.mxu0 0.0
        %1611 = vmatpush1.xpose.msra.mxu0 0.0
        %1612 = vmatprep.subr.mxu0 0.0
        %1613 = vmatpush1.xpose.msra.mxu0 0.0
        %1614 = vmatprep.subr.mxu0 0.0
        %1615 = vmatpush1.xpose.msra.mxu0 0.0
        %1616 = vmatprep.subr.mxu0 0.0
        %1617 = vmatpush1.xpose.msra.mxu0 0.0
        %1618 = vmatprep.subr.mxu0 0.0
        %1619 = vmatpush1.xpose.msra.mxu0 0.0
        %1620 = vmatprep.subr.mxu0 0.0
        %1621 = vmatpush1.xpose.msra.mxu0 0.0
        %1622 = vmatprep.subr.mxu0 0.0
        %1623 = vmatpush1.xpose.msra.mxu0 0.0
        %1624 = vmatprep.subr.mxu0 0.0
        %1625 = vmatpush1.xpose.msra.mxu0 0.0
        %1626 = vmatprep.subr.mxu0 0.0
        %1627 = vmatpush1.xpose.msra.mxu0 0.0
        %1628 = vmatprep.subr.mxu0 0.0
        %1629 = vmatpush1.xpose.msra.mxu0 0.0
        %1630 = vmatprep.subr.mxu0 0.0
        %1631 = vmatpush1.xpose.msra.mxu0 0.0
        %1632 = vmatprep.subr.mxu0 0.0
        %1633 = vmatpush1.xpose.msra.mxu0 0.0
        %1634 = vmatprep.subr.mxu0 0.0
        %1635 = vmatpush1.xpose.msra.mxu0 0.0
        %1636 = vmatprep.subr.mxu0 0.0
        %1637 = vmatpush1.xpose.msra.mxu0 0.0
        %1638 = vmatprep.subr.mxu0 0.0
        %1639 = vmatpush1.xpose.msra.mxu0 0.0
        %1640 = vmatprep.subr.mxu0 0.0
        %1641 = vmatpush1.xpose.msra.mxu0 0.0
        %1642 = vmatprep.subr.mxu0 0.0
        %1643 = vmatpush1.xpose.msra.mxu0 0.0
        %1644 = vmatprep.subr.mxu0 0.0
        %1645 = vmatpush1.xpose.msra.mxu0 0.0
        %1646 = vmatprep.subr.mxu0 0.0
        %1647 = vmatpush1.xpose.msra.mxu0 0.0
        %1648 = vmatprep.subr.mxu0 0.0
        %1649 = vmatpush1.xpose.msra.mxu0 0.0
        %1650 = vmatprep.subr.mxu0 0.0
        %1651 = vmatpush1.xpose.msra.mxu0 0.0
        %1652 = vmatprep.subr.mxu0 0.0
        %1653 = vmatpush1.xpose.msra.mxu0 0.0
        %1654 = vmatprep.subr.mxu0 0.0
        %1655 = vmatpush1.xpose.msra.mxu0 0.0
        %1656 = vmatprep.subr.mxu0 0.0
        %1657 = vmatpush1.xpose.msra.mxu0 0.0
        %1658 = vmatprep.mubr.f32.mxu0 0.0
        %v1659 = vand.u32 %v732, 4294901760
        %1660 = vmatmul.mubr.f32.gmra.mrb[0].mxu0 %v1659
        %v1661 = vpop.f32.mrb[0].mxu0
        %v1662 = vadd.f32 %v1590, %v1661
        %v1663 = vpop.f32.mrb[0].mxu0
        %1664 = vdwg.mxu0
        %v1665 = vlaneseq
        %v1666 = vshrl.u32 %v1665, 7
        %v1667 = vlaneseq
        %v1668 = vand.u32 %v1667, 127
        %vm1669 = vcmp.le.s32.totalorder %v1668, %v1666
        %v1670 = vsel %vm1669, %v1662, -1e+30
        %vm1671 = vcmask 64512
        %v1672 = vsel %vm1671, %v1670, -inf
        %1673 = vmax.xlane.f32.xlu0 %v1672
        %v1674 = vpop.xlane.xlu0 %1673
        %v1675 = vsub.f32 %v1670, %v1674
        %v1676 = vmul.f32 %v1675, 1.442695
        %v1677 = vpow.pop %v1676
        %v1678 = vsel %vm1671, %v1677, 0.0
        %1679 = vadd.xlane.f32.xlu0 %v1678
        %v1680 = vpop.xlane.xlu0 %1679
        %v1681 = vrcp.pop %v1680
        %v1682 = vmul.f32 %v1677, %v1681
        %v1684 = vsel %vm1671, %v1682, 0
        %1686 = vmatprep.subr.mxu0 0.0
        %v1687 = vand.u32 %v1216, 4294901760
        %1688 = vmatpush1.msra.mxu0 %v1687
        %1689 = vmatprep.subr.mxu0 0.0
        %1690 = vmatpush1.msra.mxu0 0.0
        %1691 = vmatprep.subr.mxu0 0.0
        %1692 = vmatpush1.msra.mxu0 0.0
        %1693 = vmatprep.subr.mxu0 0.0
        %1694 = vmatpush1.msra.mxu0 0.0
        %1695 = vmatprep.subr.mxu0 0.0
        %1696 = vmatpush1.msra.mxu0 0.0
        %1697 = vmatprep.subr.mxu0 0.0
        %1698 = vmatpush1.msra.mxu0 0.0
        %1699 = vmatprep.subr.mxu0 0.0
        %1700 = vmatpush1.msra.mxu0 0.0
        %1701 = vmatprep.subr.mxu0 0.0
        %1702 = vmatpush1.msra.mxu0 0.0
        %1703 = vmatprep.subr.mxu0 0.0
        %1704 = vmatpush1.msra.mxu0 0.0
        %1705 = vmatprep.subr.mxu0 0.0
        %1706 = vmatpush1.msra.mxu0 0.0
        %1707 = vmatprep.subr.mxu0 0.0
        %1708 = vmatpush1.msra.mxu0 0.0
        %1709 = vmatprep.subr.mxu0 0.0
        %1710 = vmatpush1.msra.mxu0 0.0
        %1711 = vmatprep.subr.mxu0 0.0
        %1712 = vmatpush1.msra.mxu0 0.0
        %1713 = vmatprep.subr.mxu0 0.0
        %1714 = vmatpush1.msra.mxu0 0.0
        %1715 = vmatprep.subr.mxu0 0.0
        %1716 = vmatpush1.msra.mxu0 0.0
        %1717 = vmatprep.subr.mxu0 0.0
        %1718 = vmatpush1.msra.mxu0 0.0
        %1719 = vmatprep.subr.mxu0 0.0
        %1720 = vmatpush1.msra.mxu0 0.0
        %1721 = vmatprep.subr.mxu0 0.0
        %1722 = vmatpush1.msra.mxu0 0.0
        %1723 = vmatprep.subr.mxu0 0.0
        %1724 = vmatpush1.msra.mxu0 0.0
        %1725 = vmatprep.subr.mxu0 0.0
        %1726 = vmatpush1.msra.mxu0 0.0
        %1727 = vmatprep.subr.mxu0 0.0
        %1728 = vmatpush1.msra.mxu0 0.0
        %1729 = vmatprep.subr.mxu0 0.0
        %1730 = vmatpush1.msra.mxu0 0.0
        %1731 = vmatprep.subr.mxu0 0.0
        %1732 = vmatpush1.msra.mxu0 0.0
        %1733 = vmatprep.subr.mxu0 0.0
        %1734 = vmatpush1.msra.mxu0 0.0
        %1735 = vmatprep.subr.mxu0 0.0
        %1736 = vmatpush1.msra.mxu0 0.0
        %1737 = vmatprep.subr.mxu0 0.0
        %1738 = vmatpush1.msra.mxu0 0.0
        %1739 = vmatprep.subr.mxu0 0.0
        %1740 = vmatpush1.msra.mxu0 0.0
        %1741 = vmatprep.subr.mxu0 0.0
        %1742 = vmatpush1.msra.mxu0 0.0
        %1743 = vmatprep.subr.mxu0 0.0
        %1744 = vmatpush1.msra.mxu0 0.0
        %1745 = vmatprep.subr.mxu0 0.0
        %1746 = vmatpush1.msra.mxu0 0.0
        %1747 = vmatprep.subr.mxu0 0.0
        %1748 = vmatpush1.msra.mxu0 0.0
        %1749 = vmatprep.subr.mxu0 0.0
        %1750 = vmatpush1.msra.mxu0 0.0
        %1751 = vmatprep.mubr.f32.mxu0 0.0
        %v1752 = vand.u32 %v1684, 4294901760
        %v1753 = vsub.f32 %v1684, %v1752
        %v1754 = vand.u32 %v1753, 4294901760
        %v1755 = vsub.f32 %v1753, %v1754
        %v1756 = vand.u32 %v1755, 4294901760
        %1757 = vmatmul.mubr.f32.gmra.mrb[0].mxu0 %v1756
        %v1758 = vpop.f32.mrb[0].mxu0
        %v1759 = vadd.f32 0.0, %v1758
        %v1760 = vpop.f32.mrb[0].mxu0
        %1761 = vdwg.mxu0
        %1762 = vmatprep.subr.mxu0 0.0
        %v1763 = vand.u32 %v1216, 4294901760
        %v1764 = vsub.f32 %v1216, %v1763
        %v1765 = vand.u32 %v1764, 4294901760
        %v1766 = vsub.f32 %v1764, %v1765
        %v1767 = vand.u32 %v1766, 4294901760
        %1768 = vmatpush1.msra.mxu0 %v1767
        %1769 = vmatprep.subr.mxu0 0.0
        %1770 = vmatpush1.msra.mxu0 0.0
        %1771 = vmatprep.subr.mxu0 0.0
        %1772 = vmatpush1.msra.mxu0 0.0
        %1773 = vmatprep.subr.mxu0 0.0
        %1774 = vmatpush1.msra.mxu0 0.0
        %1775 = vmatprep.subr.mxu0 0.0
        %1776 = vmatpush1.msra.mxu0 0.0
        %1777 = vmatprep.subr.mxu0 0.0
        %1778 = vmatpush1.msra.mxu0 0.0
        %1779 = vmatprep.subr.mxu0 0.0
        %1780 = vmatpush1.msra.mxu0 0.0
        %1781 = vmatprep.subr.mxu0 0.0
        %1782 = vmatpush1.msra.mxu0 0.0
        %1783 = vmatprep.subr.mxu0 0.0
        %1784 = vmatpush1.msra.mxu0 0.0
        %1785 = vmatprep.subr.mxu0 0.0
        %1786 = vmatpush1.msra.mxu0 0.0
        %1787 = vmatprep.subr.mxu0 0.0
        %1788 = vmatpush1.msra.mxu0 0.0
        %1789 = vmatprep.subr.mxu0 0.0
        %1790 = vmatpush1.msra.mxu0 0.0
        %1791 = vmatprep.subr.mxu0 0.0
        %1792 = vmatpush1.msra.mxu0 0.0
        %1793 = vmatprep.subr.mxu0 0.0
        %1794 = vmatpush1.msra.mxu0 0.0
        %1795 = vmatprep.subr.mxu0 0.0
        %1796 = vmatpush1.msra.mxu0 0.0
        %1797 = vmatprep.subr.mxu0 0.0
        %1798 = vmatpush1.msra.mxu0 0.0
        %1799 = vmatprep.subr.mxu0 0.0
        %1800 = vmatpush1.msra.mxu0 0.0
        %1801 = vmatprep.subr.mxu0 0.0
        %1802 = vmatpush1.msra.mxu0 0.0
        %1803 = vmatprep.subr.mxu0 0.0
        %1804 = vmatpush1.msra.mxu0 0.0
        %1805 = vmatprep.subr.mxu0 0.0
        %1806 = vmatpush1.msra.mxu0 0.0
        %1807 = vmatprep.subr.mxu0 0.0
        %1808 = vmatpush1.msra.mxu0 0.0
        %1809 = vmatprep.subr.mxu0 0.0
        %1810 = vmatpush1.msra.mxu0 0.0
        %1811 = vmatprep.subr.mxu0 0.0
        %1812 = vmatpush1.msra.mxu0 0.0
        %1813 = vmatprep.subr.mxu0 0.0
        %1814 = vmatpush1.msra.mxu0 0.0
        %1815 = vmatprep.subr.mxu0 0.0
        %1816 = vmatpush1.msra.mxu0 0.0
        %1817 = vmatprep.subr.mxu0 0.0
        %1818 = vmatpush1.msra.mxu0 0.0
        %1819 = vmatprep.subr.mxu0 0.0
        %1820 = vmatpush1.msra.mxu0 0.0
        %1821 = vmatprep.subr.mxu0 0.0
        %1822 = vmatpush1.msra.mxu0 0.0
        %1823 = vmatprep.subr.mxu0 0.0
        %1824 = vmatpush1.msra.mxu0 0.0
        %1825 = vmatprep.subr.mxu0 0.0
        %1826 = vmatpush1.msra.mxu0 0.0
        %1827 = vmatprep.subr.mxu0 0.0
        %1828 = vmatpush1.msra.mxu0 0.0
        %1829 = vmatprep.subr.mxu0 0.0
        %1830 = vmatpush1.msra.mxu0 0.0
        %1831 = vmatprep.mubr.f32.mxu0 0.0
        %v1832 = vand.u32 %v1684, 4294901760
        %1833 = vmatmul.mubr.f32.gmra.mrb[0].mxu0 %v1832
        %v1834 = vpop.f32.mrb[0].mxu0
        %v1835 = vadd.f32 %v1759, %v1834
        %v1836 = vpop.f32.mrb[0].mxu0
        %1837 = vdwg.mxu0
        %1838 = vmatprep.subr.mxu0 0.0
        %v1839 = vand.u32 %v1216, 4294901760
        %v1840 = vsub.f32 %v1216, %v1839
        %1841 = vmatpush1.msra.mxu0 %v1840
        %1842 = vmatprep.subr.mxu0 0.0
        %1843 = vmatpush1.msra.mxu0 0.0
        %1844 = vmatprep.subr.mxu0 0.0
        %1845 = vmatpush1.msra.mxu0 0.0
        %1846 = vmatprep.subr.mxu0 0.0
        %1847 = vmatpush1.msra.mxu0 0.0
        %1848 = vmatprep.subr.mxu0 0.0
        %1849 = vmatpush1.msra.mxu0 0.0
        %1850 = vmatprep.subr.mxu0 0.0
        %1851 = vmatpush1.msra.mxu0 0.0
        %1852 = vmatprep.subr.mxu0 0.0
        %1853 = vmatpush1.msra.mxu0 0.0
        %1854 = vmatprep.subr.mxu0 0.0
        %1855 = vmatpush1.msra.mxu0 0.0
        %1856 = vmatprep.subr.mxu0 0.0
        %1857 = vmatpush1.msra.mxu0 0.0
        %1858 = vmatprep.subr.mxu0 0.0
        %1859 = vmatpush1.msra.mxu0 0.0
        %1860 = vmatprep.subr.mxu0 0.0
        %1861 = vmatpush1.msra.mxu0 0.0
        %1862 = vmatprep.subr.mxu0 0.0
        %1863 = vmatpush1.msra.mxu0 0.0
        %1864 = vmatprep.subr.mxu0 0.0
        %1865 = vmatpush1.msra.mxu0 0.0
        %1866 = vmatprep.subr.mxu0 0.0
        %1867 = vmatpush1.msra.mxu0 0.0
        %1868 = vmatprep.subr.mxu0 0.0
        %1869 = vmatpush1.msra.mxu0 0.0
        %1870 = vmatprep.subr.mxu0 0.0
        %1871 = vmatpush1.msra.mxu0 0.0
        %1872 = vmatprep.subr.mxu0 0.0
        %1873 = vmatpush1.msra.mxu0 0.0
        %1874 = vmatprep.subr.mxu0 0.0
        %1875 = vmatpush1.msra.mxu0 0.0
        %1876 = vmatprep.subr.mxu0 0.0
        %1877 = vmatpush1.msra.mxu0 0.0
        %1878 = vmatprep.subr.mxu0 0.0
        %1879 = vmatpush1.msra.mxu0 0.0
        %1880 = vmatprep.subr.mxu0 0.0
        %1881 = vmatpush1.msra.mxu0 0.0
        %1882 = vmatprep.subr.mxu0 0.0
        %1883 = vmatpush1.msra.mxu0 0.0
        %1884 = vmatprep.subr.mxu0 0.0
        %1885 = vmatpush1.msra.mxu0 0.0
        %1886 = vmatprep.subr.mxu0 0.0
        %1887 = vmatpush1.msra.mxu0 0.0
        %1888 = vmatprep.subr.mxu0 0.0
        %1889 = vmatpush1.msra.mxu0 0.0
        %1890 = vmatprep.subr.mxu0 0.0
        %1891 = vmatpush1.msra.mxu0 0.0
        %1892 = vmatprep.subr.mxu0 0.0
        %1893 = vmatpush1.msra.mxu0 0.0
        %1894 = vmatprep.subr.mxu0 0.0
        %1895 = vmatpush1.msra.mxu0 0.0
        %1896 = vmatprep.subr.mxu0 0.0
        %1897 = vmatpush1.msra.mxu0 0.0
        %1898 = vmatprep.subr.mxu0 0.0
        %1899 = vmatpush1.msra.mxu0 0.0
        %1900 = vmatprep.subr.mxu0 0.0
        %1901 = vmatpush1.msra.mxu0 0.0
        %1902 = vmatprep.subr.mxu0 0.0
        %1903 = vmatpush1.msra.mxu0 0.0
        %1904 = vmatprep.mubr.f32.mxu0 0.0
        %v1905 = vand.u32 %v1684, 4294901760
        %v1906 = vsub.f32 %v1684, %v1905
        %1907 = vmatmul.mubr.f32.gmra.mrb[0].mxu0 %v1906
        %v1908 = vpop.f32.mrb[0].mxu0
        %v1909 = vadd.f32 %v1835, %v1908
        %v1910 = vpop.f32.mrb[0].mxu0
        %1911 = vdwg.mxu0
        %1912 = vmatprep.subr.mxu0 0.0
        %v1913 = vand.u32 %v1216, 4294901760
        %1914 = vmatpush1.msra.mxu0 %v1913
        %1915 = vmatprep.subr.mxu0 0.0
        %1916 = vmatpush1.msra.mxu0 0.0
        %1917 = vmatprep.subr.mxu0 0.0
        %1918 = vmatpush1.msra.mxu0 0.0
        %1919 = vmatprep.subr.mxu0 0.0
        %1920 = vmatpush1.msra.mxu0 0.0
        %1921 = vmatprep.subr.mxu0 0.0
        %1922 = vmatpush1.msra.mxu0 0.0
        %1923 = vmatprep.subr.mxu0 0.0
        %1924 = vmatpush1.msra.mxu0 0.0
        %1925 = vmatprep.subr.mxu0 0.0
        %1926 = vmatpush1.msra.mxu0 0.0
        %1927 = vmatprep.subr.mxu0 0.0
        %1928 = vmatpush1.msra.mxu0 0.0
        %1929 = vmatprep.subr.mxu0 0.0
        %1930 = vmatpush1.msra.mxu0 0.0
        %1931 = vmatprep.subr.mxu0 0.0
        %1932 = vmatpush1.msra.mxu0 0.0
        %1933 = vmatprep.subr.mxu0 0.0
        %1934 = vmatpush1.msra.mxu0 0.0
        %1935 = vmatprep.subr.mxu0 0.0
        %1936 = vmatpush1.msra.mxu0 0.0
        %1937 = vmatprep.subr.mxu0 0.0
        %1938 = vmatpush1.msra.mxu0 0.0
        %1939 = vmatprep.subr.mxu0 0.0
        %1940 = vmatpush1.msra.mxu0 0.0
        %1941 = vmatprep.subr.mxu0 0.0
        %1942 = vmatpush1.msra.mxu0 0.0
        %1943 = vmatprep.subr.mxu0 0.0
        %1944 = vmatpush1.msra.mxu0 0.0
        %1945 = vmatprep.subr.mxu0 0.0
        %1946 = vmatpush1.msra.mxu0 0.0
        %1947 = vmatprep.subr.mxu0 0.0
        %1948 = vmatpush1.msra.mxu0 0.0
        %1949 = vmatprep.subr.mxu0 0.0
        %1950 = vmatpush1.msra.mxu0 0.0
        %1951 = vmatprep.subr.mxu0 0.0
        %1952 = vmatpush1.msra.mxu0 0.0
        %1953 = vmatprep.subr.mxu0 0.0
        %1954 = vmatpush1.msra.mxu0 0.0
        %1955 = vmatprep.subr.mxu0 0.0
        %1956 = vmatpush1.msra.mxu0 0.0
        %1957 = vmatprep.subr.mxu0 0.0
        %1958 = vmatpush1.msra.mxu0 0.0
        %1959 = vmatprep.subr.mxu0 0.0
        %1960 = vmatpush1.msra.mxu0 0.0
        %1961 = vmatprep.subr.mxu0 0.0
        %1962 = vmatpush1.msra.mxu0 0.0
        %1963 = vmatprep.subr.mxu0 0.0
        %1964 = vmatpush1.msra.mxu0 0.0
        %1965 = vmatprep.subr.mxu0 0.0
        %1966 = vmatpush1.msra.mxu0 0.0
        %1967 = vmatprep.subr.mxu0 0.0
        %1968 = vmatpush1.msra.mxu0 0.0
        %1969 = vmatprep.subr.mxu0 0.0
        %1970 = vmatpush1.msra.mxu0 0.0
        %1971 = vmatprep.subr.mxu0 0.0
        %1972 = vmatpush1.msra.mxu0 0.0
        %1973 = vmatprep.subr.mxu0 0.0
        %1974 = vmatpush1.msra.mxu0 0.0
        %1975 = vmatprep.subr.mxu0 0.0
        %1976 = vmatpush1.msra.mxu0 0.0
        %1977 = vmatprep.mubr.f32.mxu0 0.0
        %v1978 = vand.u32 %v1684, 4294901760
        %v1979 = vsub.f32 %v1684, %v1978
        %v1980 = vand.u32 %v1979, 4294901760
        %1981 = vmatmul.mubr.f32.gmra.mrb[0].mxu0 %v1980
        %v1982 = vpop.f32.mrb[0].mxu0
        %v1983 = vadd.f32 %v1909, %v1982
        %v1984 = vpop.f32.mrb[0].mxu0
        %1985 = vdwg.mxu0
        %1986 = vmatprep.subr.mxu0 0.0
        %v1987 = vand.u32 %v1216, 4294901760
        %v1988 = vsub.f32 %v1216, %v1987
        %v1989 = vand.u32 %v1988, 4294901760
        %1990 = vmatpush1.msra.mxu0 %v1989
        %1991 = vmatprep.subr.mxu0 0.0
        %1992 = vmatpush1.msra.mxu0 0.0
        %1993 = vmatprep.subr.mxu0 0.0
        %1994 = vmatpush1.msra.mxu0 0.0
        %1995 = vmatprep.subr.mxu0 0.0
        %1996 = vmatpush1.msra.mxu0 0.0
        %1997 = vmatprep.subr.mxu0 0.0
        %1998 = vmatpush1.msra.mxu0 0.0
        %1999 = vmatprep.subr.mxu0 0.0
        %2000 = vmatpush1.msra.mxu0 0.0
        %2001 = vmatprep.subr.mxu0 0.0
        %2002 = vmatpush1.msra.mxu0 0.0
        %2003 = vmatprep.subr.mxu0 0.0
        %2004 = vmatpush1.msra.mxu0 0.0
        %2005 = vmatprep.subr.mxu0 0.0
        %2006 = vmatpush1.msra.mxu0 0.0
        %2007 = vmatprep.subr.mxu0 0.0
        %2008 = vmatpush1.msra.mxu0 0.0
        %2009 = vmatprep.subr.mxu0 0.0
        %2010 = vmatpush1.msra.mxu0 0.0
        %2011 = vmatprep.subr.mxu0 0.0
        %2012 = vmatpush1.msra.mxu0 0.0
        %2013 = vmatprep.subr.mxu0 0.0
        %2014 = vmatpush1.msra.mxu0 0.0
        %2015 = vmatprep.subr.mxu0 0.0
        %2016 = vmatpush1.msra.mxu0 0.0
        %2017 = vmatprep.subr.mxu0 0.0
        %2018 = vmatpush1.msra.mxu0 0.0
        %2019 = vmatprep.subr.mxu0 0.0
        %2020 = vmatpush1.msra.mxu0 0.0
        %2021 = vmatprep.subr.mxu0 0.0
        %2022 = vmatpush1.msra.mxu0 0.0
        %2023 = vmatprep.subr.mxu0 0.0
        %2024 = vmatpush1.msra.mxu0 0.0
        %2025 = vmatprep.subr.mxu0 0.0
        %2026 = vmatpush1.msra.mxu0 0.0
        %2027 = vmatprep.subr.mxu0 0.0
        %2028 = vmatpush1.msra.mxu0 0.0
        %2029 = vmatprep.subr.mxu0 0.0
        %2030 = vmatpush1.msra.mxu0 0.0
        %2031 = vmatprep.subr.mxu0 0.0
        %2032 = vmatpush1.msra.mxu0 0.0
        %2033 = vmatprep.subr.mxu0 0.0
        %2034 = vmatpush1.msra.mxu0 0.0
        %2035 = vmatprep.subr.mxu0 0.0
        %2036 = vmatpush1.msra.mxu0 0.0
        %2037 = vmatprep.subr.mxu0 0.0
        %2038 = vmatpush1.msra.mxu0 0.0
        %2039 = vmatprep.subr.mxu0 0.0
        %2040 = vmatpush1.msra.mxu0 0.0
        %2041 = vmatprep.subr.mxu0 0.0
        %2042 = vmatpush1.msra.mxu0 0.0
        %2043 = vmatprep.subr.mxu0 0.0
        %2044 = vmatpush1.msra.mxu0 0.0
        %2045 = vmatprep.subr.mxu0 0.0
        %2046 = vmatpush1.msra.mxu0 0.0
        %2047 = vmatprep.subr.mxu0 0.0
        %2048 = vmatpush1.msra.mxu0 0.0
        %2049 = vmatprep.subr.mxu0 0.0
        %2050 = vmatpush1.msra.mxu0 0.0
        %2051 = vmatprep.subr.mxu0 0.0
        %2052 = vmatpush1.msra.mxu0 0.0
        %2053 = vmatprep.mubr.f32.mxu0 0.0
        %v2054 = vand.u32 %v1684, 4294901760
        %2055 = vmatmul.mubr.f32.gmra.mrb[0].mxu0 %v2054
        %v2056 = vpop.f32.mrb[0].mxu0
        %v2057 = vadd.f32 %v1983, %v2056
        %v2058 = vpop.f32.mrb[0].mxu0
        %2059 = vdwg.mxu0
        %2060 = vmatprep.subr.mxu0 0.0
        %v2061 = vand.u32 %v1216, 4294901760
        %2062 = vmatpush1.msra.mxu0 %v2061
        %2063 = vmatprep.subr.mxu0 0.0
        %2064 = vmatpush1.msra.mxu0 0.0
        %2065 = vmatprep.subr.mxu0 0.0
        %2066 = vmatpush1.msra.mxu0 0.0
        %2067 = vmatprep.subr.mxu0 0.0
        %2068 = vmatpush1.msra.mxu0 0.0
        %2069 = vmatprep.subr.mxu0 0.0
        %2070 = vmatpush1.msra.mxu0 0.0
        %2071 = vmatprep.subr.mxu0 0.0
        %2072 = vmatpush1.msra.mxu0 0.0
        %2073 = vmatprep.subr.mxu0 0.0
        %2074 = vmatpush1.msra.mxu0 0.0
        %2075 = vmatprep.subr.mxu0 0.0
        %2076 = vmatpush1.msra.mxu0 0.0
        %2077 = vmatprep.subr.mxu0 0.0
        %2078 = vmatpush1.msra.mxu0 0.0
        %2079 = vmatprep.subr.mxu0 0.0
        %2080 = vmatpush1.msra.mxu0 0.0
        %2081 = vmatprep.subr.mxu0 0.0
        %2082 = vmatpush1.msra.mxu0 0.0
        %2083 = vmatprep.subr.mxu0 0.0
        %2084 = vmatpush1.msra.mxu0 0.0
        %2085 = vmatprep.subr.mxu0 0.0
        %2086 = vmatpush1.msra.mxu0 0.0
        %2087 = vmatprep.subr.mxu0 0.0
        %2088 = vmatpush1.msra.mxu0 0.0
        %2089 = vmatprep.subr.mxu0 0.0
        %2090 = vmatpush1.msra.mxu0 0.0
        %2091 = vmatprep.subr.mxu0 0.0
        %2092 = vmatpush1.msra.mxu0 0.0
        %2093 = vmatprep.subr.mxu0 0.0
        %2094 = vmatpush1.msra.mxu0 0.0
        %2095 = vmatprep.subr.mxu0 0.0
        %2096 = vmatpush1.msra.mxu0 0.0
        %2097 = vmatprep.subr.mxu0 0.0
        %2098 = vmatpush1.msra.mxu0 0.0
        %2099 = vmatprep.subr.mxu0 0.0
        %2100 = vmatpush1.msra.mxu0 0.0
        %2101 = vmatprep.subr.mxu0 0.0
        %2102 = vmatpush1.msra.mxu0 0.0
        %2103 = vmatprep.subr.mxu0 0.0
        %2104 = vmatpush1.msra.mxu0 0.0
        %2105 = vmatprep.subr.mxu0 0.0
        %2106 = vmatpush1.msra.mxu0 0.0
        %2107 = vmatprep.subr.mxu0 0.0
        %2108 = vmatpush1.msra.mxu0 0.0
        %2109 = vmatprep.subr.mxu0 0.0
        %2110 = vmatpush1.msra.mxu0 0.0
        %2111 = vmatprep.subr.mxu0 0.0
        %2112 = vmatpush1.msra.mxu0 0.0
        %2113 = vmatprep.subr.mxu0 0.0
        %2114 = vmatpush1.msra.mxu0 0.0
        %2115 = vmatprep.subr.mxu0 0.0
        %2116 = vmatpush1.msra.mxu0 0.0
        %2117 = vmatprep.subr.mxu0 0.0
        %2118 = vmatpush1.msra.mxu0 0.0
        %2119 = vmatprep.subr.mxu0 0.0
        %2120 = vmatpush1.msra.mxu0 0.0
        %2121 = vmatprep.subr.mxu0 0.0
        %2122 = vmatpush1.msra.mxu0 0.0
        %2123 = vmatprep.subr.mxu0 0.0
        %2124 = vmatpush1.msra.mxu0 0.0
        %2125 = vmatprep.mubr.f32.mxu0 0.0
        %v2126 = vand.u32 %v1684, 4294901760
        %2127 = vmatmul.mubr.f32.gmra.mrb[0].mxu0 %v2126
        %v2128 = vpop.f32.mrb[0].mxu0
        %v2129 = vadd.f32 %v2057, %v2128
        %v2130 = vpop.f32.mrb[0].mxu0
        %2131 = vdwg.mxu0
        %2132 = vst [vmem:[%s173] sm:$0xff] %v2129
        %s2133 = sand.u32 %s75, 1
        %s2134 = scalar_lea.sflag [#allocation4], %s2133
        %s2135 = sand.u32 %s75, 1
        %s2136 = smul.addr %s2135, 8
        %s2137 = scalar_lea.vmem [#allocation7], %s2136
        // Predicated region
        $region37: #{head_forward.1} parent=27 // pred_check
          %p2138 = pneg %p85
        $region38: #{head_forward.1} parent=27 // pred_check_branch
          %2140 = sbr.rel (%p2138) target = $region40
        $region39: #{head_forward.1} parent=27 // pred_region
          %s2142 = ssub.s32 128, 128
          %2143 = vsyncadd %s2134, %s2142
          %s2144 = smul.addr %s20, 128
          %s2145 = scalar_lea.hbm %s2, %s2144
          %s2147 = sshll.u32 %s2137, 4
          %s2148 = int_to_ptr.vmem [resolvable:$true] %s2147
          %2150 = dma.vmem_to_hbm [thread:$0]  %s2148, 128, %s2145, %s2134
        $region40: #{head_forward.1} parent=27 // pred_fallthru
          _
      $region28: #{head_forward.1} parent=5 // pred_fallthru
        _
      %p2151 = scmp.le.s32.totalorder 2, %s15
      // Predicated region
      $region41: #{head_forward.1} parent=5 // pred_check
        %p2152 = pneg %p2151
      $region42: #{head_forward.1} parent=5 // pred_check_branch
        %2154 = sbr.rel (%p2152) target = $region44
      $region43: #{head_forward.1} parent=5 // pred_region
        %s2155 = ssub.s32 %s15, 2
        // Predicated region
        $region45: #{head_forward.1} parent=43 // pred_check
          %p2156 = pneg %p91
        $region46: #{head_forward.1} parent=43 // pred_check_branch
          %2158 = sbr.rel (%p2156) target = $region48
        $region47: #{head_forward.1} parent=43 // pred_region
          %s2159 = sand.u32 %s76, 1
          %s2160 = scalar_lea.sflag [#allocation4], %s2159
          %s2161 = sand.u32 %s76, 1
          %s2162 = smul.addr %s2161, 8
          %s2163 = scalar_lea.vmem [#allocation7], %s2162
          %2164 = dma.done %s2160, 128
        $region48: #{head_forward.1} parent=43 // pred_fallthru
          _
      $region44: #{head_forward.1} parent=5 // pred_fallthru
        _
    $region6: #{head_forward.1} parent=1 // loop_footer
      %s19 = sadd.s32 1, %s15
    $region7: #{head_forward.1} parent=1 // loop_footer_branch
      %14 = sbr.rel target = $region3
    $region8: #{head_forward.1} parent=1 // loop_exit
      _
    %2165 = vsyncpa [#allocation3], 1
    %s2166 = scalar_lea.sflag [#allocation3], 1
    %2167 = vsyncpa %s2166, 1
    %2168 = vsyncpa [#allocation6], 1
    %2169 = vsyncpa [#allocation4], 1
    %s2170 = scalar_lea.sflag [#allocation4], 1
    %2171 = vsyncpa %s2170, 1

</llo_original>
